<compile_context>
chip_gen: v5e
topology: v5e:2x2
jax: 0.10.0
libtpu: 0.0.40
codegen_flags: <defaults>
</compile_context>

<pallas_src>
import functools

import jax
import jax.numpy as jnp
from jax.experimental import pallas as pl
from jax.experimental.pallas import tpu as pltpu

EPS = 1e-5          # nn.BatchNorm2d default eps
NEG_SLOPE = 0.01    # nn.LeakyReLU() default negative_slope


# ----------------------------- kernels ------------------------------------- #

def _conv_from_refs(x_ref, w_ref, m_ref, *, W, HW, P):
    """Fused 1x1 + 3x3 'same' conv on one image, flat (h, w) pixel layout.

    x_ref : (1, Cin, HW + 2P) flat image, pixel axis zero-padded by P = W+1
    w_ref : (9, Cout, Cin)    fused weights, tap index t = 3*dy + dx
            (rows [:C1] of each tap are zero except the centre tap = 1x1 branch)
    m_ref : (9, 1, HW)        per-tap edge-validity masks (1.0 inside image)
    returns (Cout, HW) f32 pre-BN conv output, both branches concatenated.
    """
    acc = None
    for dy in range(3):
        for dx in range(3):
            t = 3 * dy + dx
            # Tap (dy, dx) of output pixel p lives at flat offset p + (dy-1)*W
            # + (dx-1); with the P-element halo this is a static in-bounds
            # slice.  Out-of-image taps are zeroed by the per-tap mask (the
            # slice then reads a neighbouring row's pixel or a halo zero).
            start = P + (dy - 1) * W + (dx - 1)
            op = x_ref[0, :, pl.ds(start, HW)]            # (Cin, HW)
            if t != 4:                                    # centre tap: no edge
                op = op * m_ref[t]                        # (1, HW) mask
            contrib = jnp.dot(w_ref[t], op,
                              preferred_element_type=jnp.float32)
            acc = contrib if acc is None else acc + contrib
    return acc                                            # (Cout, HW) f32


def _stats_kernel(x_ref, w_ref, m_ref, s1_ref, s2_ref, *, W, HW, P):
    """Pass 1: per-image BN partial sums (conv output never touches HBM)."""
    y = _conv_from_refs(x_ref, w_ref, m_ref, W=W, HW=HW, P=P)
    s1_ref[0, :, :] = jnp.sum(y, axis=1, keepdims=True)        # (Cout, 1)
    s2_ref[0, :, :] = jnp.sum(y * y, axis=1, keepdims=True)    # (Cout, 1)


def _bn_lrelu_kernel(x_ref, w_ref, m_ref, scale_ref, shift_ref, o_ref,
                     *, W, HW, P):
    """Pass 2: recompute conv, apply global-stat BN (one FMA) + LeakyReLU."""
    y = _conv_from_refs(x_ref, w_ref, m_ref, W=W, HW=HW, P=P)
    yn = y * scale_ref[...] + shift_ref[...]                   # (Cout,1) bcast
    o_ref[0, :, :] = jnp.where(yn > 0, yn, NEG_SLOPE * yn)


# ----------------------------- wrapper -------------------------------------- #

def simple_block_forward(x_nchw, params, *, use_bf16_gemm=False):
    (w1, b1, g1, be1, w3, b3, g3, be3) = params
    # Conv bias is a no-op under training-mode BatchNorm (it only shifts the
    # per-channel mean, which BN subtracts), so it is folded away entirely.
    del b1, b3

    N, Cin, H, W = x_nchw.shape
    C1, C3 = int(w1.shape[0]), int(w3.shape[0])
    Cout = C1 + C3
    HW = H * W
    P = W + 1                        # flat-axis halo = max |tap offset|
    HWP = HW + 2 * P
    M = N * HW                       # BN denominator (real pixel count)

    gemm_dtype = jnp.bfloat16 if use_bf16_gemm else jnp.float32

    # ---- layout-only wrapper glue (one cheap pass over the input) ----------
    x_flat = x_nchw.astype(jnp.float32).reshape(N, Cin, HW)     # metadata only
    x_flat = jnp.pad(x_flat, ((0, 0), (0, 0), (P, P))).astype(gemm_dtype)

    # Fused two-branch weights, tap-major (t = 3*dy + dx): rows [C1:] = 3x3
    # branch, rows [:C1] = 1x1 branch on the centre tap only.
    wcat = jnp.zeros((9, Cout, Cin), jnp.float32)
    wcat = wcat.at[:, C1:, :].set(
        jnp.transpose(w3, (2, 3, 0, 1)).reshape(9, C3, Cin))
    wcat = wcat.at[4, :C1, :].set(w1[:, :, 0, 0])
    wcat = wcat.astype(gemm_dtype)

    # Per-tap edge-validity masks (tiny, VMEM-resident across the grid).
    rr = jnp.arange(HW, dtype=jnp.int32) // W
    cc = jnp.arange(HW, dtype=jnp.int32) % W
    tap_masks = []
    for dy in range(3):
        for dx in range(3):
            ok = jnp.ones((HW,), jnp.bool_)
            if dy == 0:
                ok = ok & (rr > 0)
            elif dy == 2:
                ok = ok & (rr < H - 1)
            if dx == 0:
                ok = ok & (cc > 0)
            elif dx == 2:
                ok = ok & (cc < W - 1)
            tap_masks.append(ok)
    tap_mask = jnp.stack(tap_masks).reshape(9, 1, HW).astype(gemm_dtype)

    cparams = pltpu.CompilerParams(
        dimension_semantics=("parallel",),
        vmem_limit_bytes=32 * 1024 * 1024,
    )

    x_spec = pl.BlockSpec((1, Cin, HWP), lambda n: (n, 0, 0))   # per-image slab
    w_spec = pl.BlockSpec((9, Cout, Cin), lambda n: (0, 0, 0))  # resident
    m_spec = pl.BlockSpec((9, 1, HW), lambda n: (0, 0, 0))      # resident

    # ---- pass 1: per-image BN partial sums ---------------------------------
    s1, s2 = pl.pallas_call(
        functools.partial(_stats_kernel, W=W, HW=HW, P=P),
        grid=(N,),
        in_specs=[x_spec, w_spec, m_spec],
        out_specs=[pl.BlockSpec((1, Cout, 1), lambda n: (n, 0, 0)),
                   pl.BlockSpec((1, Cout, 1), lambda n: (n, 0, 0))],
        out_shape=(jax.ShapeDtypeStruct((N, Cout, 1), jnp.float32),
                   jax.ShapeDtypeStruct((N, Cout, 1), jnp.float32)),
        compiler_params=cparams,
    )(x_flat, wcat, tap_mask)

    # O(Cout) global statistics -> per-channel scale / shift (training-mode
    # BN, biased variance, var = E[y^2] - E[y]^2).
    inv_m = 1.0 / float(M)
    mean = jnp.sum(s1, axis=0) * inv_m                          # (Cout, 1)
    var = jnp.sum(s2, axis=0) * inv_m - mean * mean
    gamma = jnp.concatenate([g1, g3]).reshape(Cout, 1).astype(jnp.float32)
    beta = jnp.concatenate([be1, be3]).reshape(Cout, 1).astype(jnp.float32)
    scale = gamma * jax.lax.rsqrt(var + EPS)
    shift = beta - mean * scale

    # ---- pass 2: recompute conv (cheaper than a (Cout, M) f32 HBM round
    # trip), normalise with global stats, LeakyReLU.  Output layout makes the
    # final NCHW view a metadata-only reshape.
    out = pl.pallas_call(
        functools.partial(_bn_lrelu_kernel, W=W, HW=HW, P=P),
        grid=(N,),
        in_specs=[x_spec, w_spec, m_spec,
                  pl.BlockSpec((Cout, 1), lambda n: (0, 0)),
                  pl.BlockSpec((Cout, 1), lambda n: (0, 0))],
        out_specs=pl.BlockSpec((1, Cout, HW), lambda n: (n, 0, 0)),
        out_shape=jax.ShapeDtypeStruct((N, Cout, HW), jnp.float32),
        compiler_params=cparams,
    )(x_flat, wcat, tap_mask, scale, shift)

    return out.reshape(N, Cout, H, W)


# ----------------------------- reference ------------------------------------ #

def _reference(x, params):
    # Pure-JAX reference reproducing the PyTorch forward (training-mode BN,
    # bias included -- it must cancel exactly in the kernel output).
    (w1, b1, g1, be1, w3, b3, g3, be3) = params
    dn = ("NCHW", "OIHW", "NCHW")
    c1 = jax.lax.conv_general_dilated(x, w1, (1, 1), [(0, 0), (0, 0)],
                                      dimension_numbers=dn) + b1[None, :, None, None]
    c3 = jax.lax.conv_general_dilated(x, w3, (1, 1), [(1, 1), (1, 1)],
                                      dimension_numbers=dn) + b3[None, :, None, None]

    def bn_act(y, g, be):
        mean = jnp.mean(y, axis=(0, 2, 3), keepdims=True)
        var = jnp.mean((y - mean) ** 2, axis=(0, 2, 3), keepdims=True)
        yn = (y - mean) * jax.lax.rsqrt(var + EPS)
        yn = yn * g[None, :, None, None] + be[None, :, None, None]
        return jnp.where(yn > 0, yn, NEG_SLOPE * yn)

    return jnp.concatenate([bn_act(c1, g1, be1), bn_act(c3, g3, be3)], axis=1)


if __name__ == "__main__":
    # Small shapes consistent with the module: SimpleBlock(in_chan=4, 8, 8)
    N, Cin, H, W = 2, 4, 16, 16
    C1, C3 = 8, 8

    key = jax.random.PRNGKey(0)
    k = jax.random.split(key, 5)
    x = jax.random.normal(k[0], (N, Cin, H, W), dtype=jnp.float32)

    # Deterministic synthetic parameters (shapes match nn.Conv2d / nn.BatchNorm2d).
    w1 = 0.1 * jax.random.normal(k[1], (C1, Cin, 1, 1), dtype=jnp.float32)
    b1 = 0.05 * jax.random.normal(k[2], (C1,), dtype=jnp.float32)
    w3 = 0.1 * jax.random.normal(k[3], (C3, Cin, 3, 3), dtype=jnp.float32)
    b3 = 0.05 * jax.random.normal(k[4], (C3,), dtype=jnp.float32)
    g1, be1 = jnp.ones((C1,), jnp.float32), jnp.zeros((C1,), jnp.float32)
    g3, be3 = jnp.ones((C3,), jnp.float32), jnp.zeros((C3,), jnp.float32)
    params = (w1, b1, g1, be1, w3, b3, g3, be3)

    out = jax.jit(simple_block_forward)(x, params)
    out = jax.block_until_ready(out)

    ref = _reference(x, params)
    assert out.shape == (N, C1 + C3, H, W), out.shape
    assert jnp.allclose(out, ref, atol=1e-4, rtol=1e-4), \
        float(jnp.max(jnp.abs(out - ref)))

    print("KERNEL_OK")
</pallas_src>

<mosaic_0001>
module attributes {stable_mosaic.version = 11 : i64} {
  func.func @_stats_kernel(%arg0: i32, %arg1: memref<1x4x290xf32, #tpu.memory_space<vmem>>, %arg2: memref<9x16x4xf32, #tpu.memory_space<vmem>>, %arg3: memref<9x1x256xf32, #tpu.memory_space<vmem>>, %arg4: memref<1x16x1xf32, #tpu.memory_space<vmem>>, %arg5: memref<1x16x1xf32, #tpu.memory_space<vmem>>) attributes {dimension_semantics = [#tpu.dimension_semantics<parallel>], iteration_bounds = array<i64: 2>, scalar_prefetch = 0 : i64, scratch_operands = 0 : i64, tpu.core_type = #tpu.core_type<tc>, window_params = [{transform_indices = @transform_0, window_bounds = array<i64: 1, 4, 290>}, {pipeline_mode = #tpu.pipeline_mode<synchronous>, transform_indices = @transform_1, window_bounds = array<i64: 9, 16, 4>}, {pipeline_mode = #tpu.pipeline_mode<synchronous>, transform_indices = @transform_2, window_bounds = array<i64: 9, 1, 256>}, {transform_indices = @transform_3, window_bounds = array<i64: 1, 16, 1>}, {transform_indices = @transform_4, window_bounds = array<i64: 1, 16, 1>}]} {
    %c0 = arith.constant 0 : index
    %c0_0 = arith.constant 0 : index
    %c0_1 = arith.constant 0 : index
    %0 = vector.load %arg1[%c0, %c0_0, %c0_1] : memref<1x4x290xf32, #tpu.memory_space<vmem>>, vector<1x4x256xf32>
    %1 = vector.shape_cast %0 : vector<1x4x256xf32> to vector<4x256xf32>
    %c0_2 = arith.constant 0 : index
    %c0_3 = arith.constant 0 : index
    %c0_4 = arith.constant 0 : index
    %2 = vector.load %arg3[%c0_2, %c0_3, %c0_4] : memref<9x1x256xf32, #tpu.memory_space<vmem>>, vector<1x1x256xf32>
    %3 = vector.shape_cast %2 : vector<1x1x256xf32> to vector<1x256xf32>
    %4 = vector.broadcast %3 : vector<1x256xf32> to vector<4x256xf32>
    %5 = arith.mulf %1, %4 : vector<4x256xf32>
    %c0_5 = arith.constant 0 : index
    %c0_6 = arith.constant 0 : index
    %c0_7 = arith.constant 0 : index
    %6 = vector.load %arg2[%c0_5, %c0_6, %c0_7] : memref<9x16x4xf32, #tpu.memory_space<vmem>>, vector<1x16x4xf32>
    %7 = vector.shape_cast %6 : vector<1x16x4xf32> to vector<16x4xf32>
    %cst = arith.constant dense<0.000000e+00> : vector<16x256xf32>
    %8 = tpu.matmul %7, %5, %cst {dimension_numbers = #tpu.dot_dimension_numbers<[1], [0], [0], [1], [0, 0, 1, 1], [], []>} : vector<16x4xf32>, vector<4x256xf32>, vector<16x256xf32> -> vector<16x256xf32>
    %c0_8 = arith.constant 0 : index
    %c0_9 = arith.constant 0 : index
    %c1 = arith.constant 1 : index
    %9 = vector.load %arg1[%c0_8, %c0_9, %c1] : memref<1x4x290xf32, #tpu.memory_space<vmem>>, vector<1x4x256xf32>
    %10 = vector.shape_cast %9 : vector<1x4x256xf32> to vector<4x256xf32>
    %c1_10 = arith.constant 1 : index
    %c0_11 = arith.constant 0 : index
    %c0_12 = arith.constant 0 : index
    %11 = vector.load %arg3[%c1_10, %c0_11, %c0_12] : memref<9x1x256xf32, #tpu.memory_space<vmem>>, vector<1x1x256xf32>
    %12 = vector.shape_cast %11 : vector<1x1x256xf32> to vector<1x256xf32>
    %13 = vector.broadcast %12 : vector<1x256xf32> to vector<4x256xf32>
    %14 = arith.mulf %10, %13 : vector<4x256xf32>
    %c1_13 = arith.constant 1 : index
    %c0_14 = arith.constant 0 : index
    %c0_15 = arith.constant 0 : index
    %15 = vector.load %arg2[%c1_13, %c0_14, %c0_15] : memref<9x16x4xf32, #tpu.memory_space<vmem>>, vector<1x16x4xf32>
    %16 = vector.shape_cast %15 : vector<1x16x4xf32> to vector<16x4xf32>
    %cst_16 = arith.constant dense<0.000000e+00> : vector<16x256xf32>
    %17 = tpu.matmul %16, %14, %cst_16 {dimension_numbers = #tpu.dot_dimension_numbers<[1], [0], [0], [1], [0, 0, 1, 1], [], []>} : vector<16x4xf32>, vector<4x256xf32>, vector<16x256xf32> -> vector<16x256xf32>
    %18 = arith.addf %8, %17 : vector<16x256xf32>
    %c0_17 = arith.constant 0 : index
    %c0_18 = arith.constant 0 : index
    %c2 = arith.constant 2 : index
    %19 = vector.load %arg1[%c0_17, %c0_18, %c2] : memref<1x4x290xf32, #tpu.memory_space<vmem>>, vector<1x4x256xf32>
    %20 = vector.shape_cast %19 : vector<1x4x256xf32> to vector<4x256xf32>
    %c2_19 = arith.constant 2 : index
    %c0_20 = arith.constant 0 : index
    %c0_21 = arith.constant 0 : index
    %21 = vector.load %arg3[%c2_19, %c0_20, %c0_21] : memref<9x1x256xf32, #tpu.memory_space<vmem>>, vector<1x1x256xf32>
    %22 = vector.shape_cast %21 : vector<1x1x256xf32> to vector<1x256xf32>
    %23 = vector.broadcast %22 : vector<1x256xf32> to vector<4x256xf32>
    %24 = arith.mulf %20, %23 : vector<4x256xf32>
    %c2_22 = arith.constant 2 : index
    %c0_23 = arith.constant 0 : index
    %c0_24 = arith.constant 0 : index
    %25 = vector.load %arg2[%c2_22, %c0_23, %c0_24] : memref<9x16x4xf32, #tpu.memory_space<vmem>>, vector<1x16x4xf32>
    %26 = vector.shape_cast %25 : vector<1x16x4xf32> to vector<16x4xf32>
    %cst_25 = arith.constant dense<0.000000e+00> : vector<16x256xf32>
    %27 = tpu.matmul %26, %24, %cst_25 {dimension_numbers = #tpu.dot_dimension_numbers<[1], [0], [0], [1], [0, 0, 1, 1], [], []>} : vector<16x4xf32>, vector<4x256xf32>, vector<16x256xf32> -> vector<16x256xf32>
    %28 = arith.addf %18, %27 : vector<16x256xf32>
    %c0_26 = arith.constant 0 : index
    %c0_27 = arith.constant 0 : index
    %c16 = arith.constant 16 : index
    %29 = vector.load %arg1[%c0_26, %c0_27, %c16] : memref<1x4x290xf32, #tpu.memory_space<vmem>>, vector<1x4x256xf32>
    %30 = vector.shape_cast %29 : vector<1x4x256xf32> to vector<4x256xf32>
    %c3 = arith.constant 3 : index
    %c0_28 = arith.constant 0 : index
    %c0_29 = arith.constant 0 : index
    %31 = vector.load %arg3[%c3, %c0_28, %c0_29] : memref<9x1x256xf32, #tpu.memory_space<vmem>>, vector<1x1x256xf32>
    %32 = vector.shape_cast %31 : vector<1x1x256xf32> to vector<1x256xf32>
    %33 = vector.broadcast %32 : vector<1x256xf32> to vector<4x256xf32>
    %34 = arith.mulf %30, %33 : vector<4x256xf32>
    %c3_30 = arith.constant 3 : index
    %c0_31 = arith.constant 0 : index
    %c0_32 = arith.constant 0 : index
    %35 = vector.load %arg2[%c3_30, %c0_31, %c0_32] : memref<9x16x4xf32, #tpu.memory_space<vmem>>, vector<1x16x4xf32>
    %36 = vector.shape_cast %35 : vector<1x16x4xf32> to vector<16x4xf32>
    %cst_33 = arith.constant dense<0.000000e+00> : vector<16x256xf32>
    %37 = tpu.matmul %36, %34, %cst_33 {dimension_numbers = #tpu.dot_dimension_numbers<[1], [0], [0], [1], [0, 0, 1, 1], [], []>} : vector<16x4xf32>, vector<4x256xf32>, vector<16x256xf32> -> vector<16x256xf32>
    %38 = arith.addf %28, %37 : vector<16x256xf32>
    %c0_34 = arith.constant 0 : index
    %c0_35 = arith.constant 0 : index
    %c17 = arith.constant 17 : index
    %39 = vector.load %arg1[%c0_34, %c0_35, %c17] : memref<1x4x290xf32, #tpu.memory_space<vmem>>, vector<1x4x256xf32>
    %40 = vector.shape_cast %39 : vector<1x4x256xf32> to vector<4x256xf32>
    %c4 = arith.constant 4 : index
    %c0_36 = arith.constant 0 : index
    %c0_37 = arith.constant 0 : index
    %41 = vector.load %arg2[%c4, %c0_36, %c0_37] : memref<9x16x4xf32, #tpu.memory_space<vmem>>, vector<1x16x4xf32>
    %42 = vector.shape_cast %41 : vector<1x16x4xf32> to vector<16x4xf32>
    %cst_38 = arith.constant dense<0.000000e+00> : vector<16x256xf32>
    %43 = tpu.matmul %42, %40, %cst_38 {dimension_numbers = #tpu.dot_dimension_numbers<[1], [0], [0], [1], [0, 0, 1, 1], [], []>} : vector<16x4xf32>, vector<4x256xf32>, vector<16x256xf32> -> vector<16x256xf32>
    %44 = arith.addf %38, %43 : vector<16x256xf32>
    %c0_39 = arith.constant 0 : index
    %c0_40 = arith.constant 0 : index
    %c18 = arith.constant 18 : index
    %45 = vector.load %arg1[%c0_39, %c0_40, %c18] : memref<1x4x290xf32, #tpu.memory_space<vmem>>, vector<1x4x256xf32>
    %46 = vector.shape_cast %45 : vector<1x4x256xf32> to vector<4x256xf32>
    %c5 = arith.constant 5 : index
    %c0_41 = arith.constant 0 : index
    %c0_42 = arith.constant 0 : index
    %47 = vector.load %arg3[%c5, %c0_41, %c0_42] : memref<9x1x256xf32, #tpu.memory_space<vmem>>, vector<1x1x256xf32>
    %48 = vector.shape_cast %47 : vector<1x1x256xf32> to vector<1x256xf32>
    %49 = vector.broadcast %48 : vector<1x256xf32> to vector<4x256xf32>
    %50 = arith.mulf %46, %49 : vector<4x256xf32>
    %c5_43 = arith.constant 5 : index
    %c0_44 = arith.constant 0 : index
    %c0_45 = arith.constant 0 : index
    %51 = vector.load %arg2[%c5_43, %c0_44, %c0_45] : memref<9x16x4xf32, #tpu.memory_space<vmem>>, vector<1x16x4xf32>
    %52 = vector.shape_cast %51 : vector<1x16x4xf32> to vector<16x4xf32>
    %cst_46 = arith.constant dense<0.000000e+00> : vector<16x256xf32>
    %53 = tpu.matmul %52, %50, %cst_46 {dimension_numbers = #tpu.dot_dimension_numbers<[1], [0], [0], [1], [0, 0, 1, 1], [], []>} : vector<16x4xf32>, vector<4x256xf32>, vector<16x256xf32> -> vector<16x256xf32>
    %54 = arith.addf %44, %53 : vector<16x256xf32>
    %c0_47 = arith.constant 0 : index
    %c0_48 = arith.constant 0 : index
    %c32 = arith.constant 32 : index
    %55 = vector.load %arg1[%c0_47, %c0_48, %c32] : memref<1x4x290xf32, #tpu.memory_space<vmem>>, vector<1x4x256xf32>
    %56 = vector.shape_cast %55 : vector<1x4x256xf32> to vector<4x256xf32>
    %c6 = arith.constant 6 : index
    %c0_49 = arith.constant 0 : index
    %c0_50 = arith.constant 0 : index
    %57 = vector.load %arg3[%c6, %c0_49, %c0_50] : memref<9x1x256xf32, #tpu.memory_space<vmem>>, vector<1x1x256xf32>
    %58 = vector.shape_cast %57 : vector<1x1x256xf32> to vector<1x256xf32>
    %59 = vector.broadcast %58 : vector<1x256xf32> to vector<4x256xf32>
    %60 = arith.mulf %56, %59 : vector<4x256xf32>
    %c6_51 = arith.constant 6 : index
    %c0_52 = arith.constant 0 : index
    %c0_53 = arith.constant 0 : index
    %61 = vector.load %arg2[%c6_51, %c0_52, %c0_53] : memref<9x16x4xf32, #tpu.memory_space<vmem>>, vector<1x16x4xf32>
    %62 = vector.shape_cast %61 : vector<1x16x4xf32> to vector<16x4xf32>
    %cst_54 = arith.constant dense<0.000000e+00> : vector<16x256xf32>
    %63 = tpu.matmul %62, %60, %cst_54 {dimension_numbers = #tpu.dot_dimension_numbers<[1], [0], [0], [1], [0, 0, 1, 1], [], []>} : vector<16x4xf32>, vector<4x256xf32>, vector<16x256xf32> -> vector<16x256xf32>
    %64 = arith.addf %54, %63 : vector<16x256xf32>
    %c0_55 = arith.constant 0 : index
    %c0_56 = arith.constant 0 : index
    %c33 = arith.constant 33 : index
    %65 = vector.load %arg1[%c0_55, %c0_56, %c33] : memref<1x4x290xf32, #tpu.memory_space<vmem>>, vector<1x4x256xf32>
    %66 = vector.shape_cast %65 : vector<1x4x256xf32> to vector<4x256xf32>
    %c7 = arith.constant 7 : index
    %c0_57 = arith.constant 0 : index
    %c0_58 = arith.constant 0 : index
    %67 = vector.load %arg3[%c7, %c0_57, %c0_58] : memref<9x1x256xf32, #tpu.memory_space<vmem>>, vector<1x1x256xf32>
    %68 = vector.shape_cast %67 : vector<1x1x256xf32> to vector<1x256xf32>
    %69 = vector.broadcast %68 : vector<1x256xf32> to vector<4x256xf32>
    %70 = arith.mulf %66, %69 : vector<4x256xf32>
    %c7_59 = arith.constant 7 : index
    %c0_60 = arith.constant 0 : index
    %c0_61 = arith.constant 0 : index
    %71 = vector.load %arg2[%c7_59, %c0_60, %c0_61] : memref<9x16x4xf32, #tpu.memory_space<vmem>>, vector<1x16x4xf32>
    %72 = vector.shape_cast %71 : vector<1x16x4xf32> to vector<16x4xf32>
    %cst_62 = arith.constant dense<0.000000e+00> : vector<16x256xf32>
    %73 = tpu.matmul %72, %70, %cst_62 {dimension_numbers = #tpu.dot_dimension_numbers<[1], [0], [0], [1], [0, 0, 1, 1], [], []>} : vector<16x4xf32>, vector<4x256xf32>, vector<16x256xf32> -> vector<16x256xf32>
    %74 = arith.addf %64, %73 : vector<16x256xf32>
    %c0_63 = arith.constant 0 : index
    %c0_64 = arith.constant 0 : index
    %c34 = arith.constant 34 : index
    %75 = vector.load %arg1[%c0_63, %c0_64, %c34] : memref<1x4x290xf32, #tpu.memory_space<vmem>>, vector<1x4x256xf32>
    %76 = vector.shape_cast %75 : vector<1x4x256xf32> to vector<4x256xf32>
    %c8 = arith.constant 8 : index
    %c0_65 = arith.constant 0 : index
    %c0_66 = arith.constant 0 : index
    %77 = vector.load %arg3[%c8, %c0_65, %c0_66] : memref<9x1x256xf32, #tpu.memory_space<vmem>>, vector<1x1x256xf32>
    %78 = vector.shape_cast %77 : vector<1x1x256xf32> to vector<1x256xf32>
    %79 = vector.broadcast %78 : vector<1x256xf32> to vector<4x256xf32>
    %80 = arith.mulf %76, %79 : vector<4x256xf32>
    %c8_67 = arith.constant 8 : index
    %c0_68 = arith.constant 0 : index
    %c0_69 = arith.constant 0 : index
    %81 = vector.load %arg2[%c8_67, %c0_68, %c0_69] : memref<9x16x4xf32, #tpu.memory_space<vmem>>, vector<1x16x4xf32>
    %82 = vector.shape_cast %81 : vector<1x16x4xf32> to vector<16x4xf32>
    %cst_70 = arith.constant dense<0.000000e+00> : vector<16x256xf32>
    %83 = tpu.matmul %82, %80, %cst_70 {dimension_numbers = #tpu.dot_dimension_numbers<[1], [0], [0], [1], [0, 0, 1, 1], [], []>} : vector<16x4xf32>, vector<4x256xf32>, vector<16x256xf32> -> vector<16x256xf32>
    %84 = arith.addf %74, %83 : vector<16x256xf32>
    %cst_71 = arith.constant dense<0.000000e+00> : vector<16xf32>
    %85 = vector.multi_reduction <add>, %84, %cst_71 [1] : vector<16x256xf32> to vector<16xf32>
    %86 = vector.shape_cast %85 : vector<16xf32> to vector<16x1xf32>
    %c0_72 = arith.constant 0 : index
    %c0_73 = arith.constant 0 : index
    %c0_74 = arith.constant 0 : index
    %87 = vector.load %arg4[%c0_72, %c0_73, %c0_74] : memref<1x16x1xf32, #tpu.memory_space<vmem>>, vector<1x16x1xf32>
    %88 = vector.shape_cast %87 : vector<1x16x1xf32> to vector<16x1xf32>
    %89 = vector.shape_cast %86 : vector<16x1xf32> to vector<1x16x1xf32>
    tpu.vector_store %arg4[%c0_72, %c0_73, %c0_74], %89 {strides = array<i32>} : memref<1x16x1xf32, #tpu.memory_space<vmem>>, vector<1x16x1xf32>,
    %90 = arith.mulf %84, %84 : vector<16x256xf32>
    %cst_75 = arith.constant dense<0.000000e+00> : vector<16xf32>
    %91 = vector.multi_reduction <add>, %90, %cst_75 [1] : vector<16x256xf32> to vector<16xf32>
    %92 = vector.shape_cast %91 : vector<16xf32> to vector<16x1xf32>
    %c0_76 = arith.constant 0 : index
    %c0_77 = arith.constant 0 : index
    %c0_78 = arith.constant 0 : index
    %93 = vector.load %arg5[%c0_76, %c0_77, %c0_78] : memref<1x16x1xf32, #tpu.memory_space<vmem>>, vector<1x16x1xf32>
    %94 = vector.shape_cast %93 : vector<1x16x1xf32> to vector<16x1xf32>
    %95 = vector.shape_cast %92 : vector<16x1xf32> to vector<1x16x1xf32>
    tpu.vector_store %arg5[%c0_76, %c0_77, %c0_78], %95 {strides = array<i32>} : memref<1x16x1xf32, #tpu.memory_space<vmem>>, vector<1x16x1xf32>,
    return
  }
  func.func @transform_0(%arg0: i32) -> (i32, i32, i32) {
    %c0_i32 = arith.constant 0 : i32
    %c0_i32_0 = arith.constant 0 : i32
    %c0_i32_1 = arith.constant 0 : i32
    return %arg0, %c0_i32, %c0_i32_0 : i32, i32, i32
  }
  func.func @transform_1(%arg0: i32) -> (i32, i32, i32) {
    %c0_i32 = arith.constant 0 : i32
    %c0_i32_0 = arith.constant 0 : i32
    %c0_i32_1 = arith.constant 0 : i32
    %c0_i32_2 = arith.constant 0 : i32
    return %c0_i32, %c0_i32_0, %c0_i32_1 : i32, i32, i32
  }
  func.func @transform_2(%arg0: i32) -> (i32, i32, i32) {
    %c0_i32 = arith.constant 0 : i32
    %c0_i32_0 = arith.constant 0 : i32
    %c0_i32_1 = arith.constant 0 : i32
    %c0_i32_2 = arith.constant 0 : i32
    return %c0_i32, %c0_i32_0, %c0_i32_1 : i32, i32, i32
  }
  func.func @transform_3(%arg0: i32) -> (i32, i32, i32) {
    %c0_i32 = arith.constant 0 : i32
    %c0_i32_0 = arith.constant 0 : i32
    %c0_i32_1 = arith.constant 0 : i32
    return %arg0, %c0_i32, %c0_i32_0 : i32, i32, i32
  }
  func.func @transform_4(%arg0: i32) -> (i32, i32, i32) {
    %c0_i32 = arith.constant 0 : i32
    %c0_i32_0 = arith.constant 0 : i32
    %c0_i32_1 = arith.constant 0 : i32
    return %arg0, %c0_i32, %c0_i32_0 : i32, i32, i32
  }
}

module attributes {stable_mosaic.version = 11 : i64} {
  func.func @_bn_lrelu_kernel(%arg0: i32, %arg1: memref<1x4x290xf32, #tpu.memory_space<vmem>>, %arg2: memref<9x16x4xf32, #tpu.memory_space<vmem>>, %arg3: memref<9x1x256xf32, #tpu.memory_space<vmem>>, %arg4: memref<16x1xf32, #tpu.memory_space<vmem>>, %arg5: memref<16x1xf32, #tpu.memory_space<vmem>>, %arg6: memref<1x16x256xf32, #tpu.memory_space<vmem>>) attributes {dimension_semantics = [#tpu.dimension_semantics<parallel>], iteration_bounds = array<i64: 2>, scalar_prefetch = 0 : i64, scratch_operands = 0 : i64, tpu.core_type = #tpu.core_type<tc>, window_params = [{transform_indices = @transform_0, window_bounds = array<i64: 1, 4, 290>}, {pipeline_mode = #tpu.pipeline_mode<synchronous>, transform_indices = @transform_1, window_bounds = array<i64: 9, 16, 4>}, {pipeline_mode = #tpu.pipeline_mode<synchronous>, transform_indices = @transform_2, window_bounds = array<i64: 9, 1, 256>}, {pipeline_mode = #tpu.pipeline_mode<synchronous>, transform_indices = @transform_3, window_bounds = array<i64: 16, 1>}, {pipeline_mode = #tpu.pipeline_mode<synchronous>, transform_indices = @transform_4, window_bounds = array<i64: 16, 1>}, {transform_indices = @transform_5, window_bounds = array<i64: 1, 16, 256>}]} {
    %c0 = arith.constant 0 : index
    %c0_0 = arith.constant 0 : index
    %c0_1 = arith.constant 0 : index
    %0 = vector.load %arg1[%c0, %c0_0, %c0_1] : memref<1x4x290xf32, #tpu.memory_space<vmem>>, vector<1x4x256xf32>
    %1 = vector.shape_cast %0 : vector<1x4x256xf32> to vector<4x256xf32>
    %c0_2 = arith.constant 0 : index
    %c0_3 = arith.constant 0 : index
    %c0_4 = arith.constant 0 : index
    %2 = vector.load %arg3[%c0_2, %c0_3, %c0_4] : memref<9x1x256xf32, #tpu.memory_space<vmem>>, vector<1x1x256xf32>
    %3 = vector.shape_cast %2 : vector<1x1x256xf32> to vector<1x256xf32>
    %4 = vector.broadcast %3 : vector<1x256xf32> to vector<4x256xf32>
    %5 = arith.mulf %1, %4 : vector<4x256xf32>
    %c0_5 = arith.constant 0 : index
    %c0_6 = arith.constant 0 : index
    %c0_7 = arith.constant 0 : index
    %6 = vector.load %arg2[%c0_5, %c0_6, %c0_7] : memref<9x16x4xf32, #tpu.memory_space<vmem>>, vector<1x16x4xf32>
    %7 = vector.shape_cast %6 : vector<1x16x4xf32> to vector<16x4xf32>
    %cst = arith.constant dense<0.000000e+00> : vector<16x256xf32>
    %8 = tpu.matmul %7, %5, %cst {dimension_numbers = #tpu.dot_dimension_numbers<[1], [0], [0], [1], [0, 0, 1, 1], [], []>} : vector<16x4xf32>, vector<4x256xf32>, vector<16x256xf32> -> vector<16x256xf32>
    %c0_8 = arith.constant 0 : index
    %c0_9 = arith.constant 0 : index
    %c1 = arith.constant 1 : index
    %9 = vector.load %arg1[%c0_8, %c0_9, %c1] : memref<1x4x290xf32, #tpu.memory_space<vmem>>, vector<1x4x256xf32>
    %10 = vector.shape_cast %9 : vector<1x4x256xf32> to vector<4x256xf32>
    %c1_10 = arith.constant 1 : index
    %c0_11 = arith.constant 0 : index
    %c0_12 = arith.constant 0 : index
    %11 = vector.load %arg3[%c1_10, %c0_11, %c0_12] : memref<9x1x256xf32, #tpu.memory_space<vmem>>, vector<1x1x256xf32>
    %12 = vector.shape_cast %11 : vector<1x1x256xf32> to vector<1x256xf32>
    %13 = vector.broadcast %12 : vector<1x256xf32> to vector<4x256xf32>
    %14 = arith.mulf %10, %13 : vector<4x256xf32>
    %c1_13 = arith.constant 1 : index
    %c0_14 = arith.constant 0 : index
    %c0_15 = arith.constant 0 : index
    %15 = vector.load %arg2[%c1_13, %c0_14, %c0_15] : memref<9x16x4xf32, #tpu.memory_space<vmem>>, vector<1x16x4xf32>
    %16 = vector.shape_cast %15 : vector<1x16x4xf32> to vector<16x4xf32>
    %cst_16 = arith.constant dense<0.000000e+00> : vector<16x256xf32>
    %17 = tpu.matmul %16, %14, %cst_16 {dimension_numbers = #tpu.dot_dimension_numbers<[1], [0], [0], [1], [0, 0, 1, 1], [], []>} : vector<16x4xf32>, vector<4x256xf32>, vector<16x256xf32> -> vector<16x256xf32>
    %18 = arith.addf %8, %17 : vector<16x256xf32>
    %c0_17 = arith.constant 0 : index
    %c0_18 = arith.constant 0 : index
    %c2 = arith.constant 2 : index
    %19 = vector.load %arg1[%c0_17, %c0_18, %c2] : memref<1x4x290xf32, #tpu.memory_space<vmem>>, vector<1x4x256xf32>
    %20 = vector.shape_cast %19 : vector<1x4x256xf32> to vector<4x256xf32>
    %c2_19 = arith.constant 2 : index
    %c0_20 = arith.constant 0 : index
    %c0_21 = arith.constant 0 : index
    %21 = vector.load %arg3[%c2_19, %c0_20, %c0_21] : memref<9x1x256xf32, #tpu.memory_space<vmem>>, vector<1x1x256xf32>
    %22 = vector.shape_cast %21 : vector<1x1x256xf32> to vector<1x256xf32>
    %23 = vector.broadcast %22 : vector<1x256xf32> to vector<4x256xf32>
    %24 = arith.mulf %20, %23 : vector<4x256xf32>
    %c2_22 = arith.constant 2 : index
    %c0_23 = arith.constant 0 : index
    %c0_24 = arith.constant 0 : index
    %25 = vector.load %arg2[%c2_22, %c0_23, %c0_24] : memref<9x16x4xf32, #tpu.memory_space<vmem>>, vector<1x16x4xf32>
    %26 = vector.shape_cast %25 : vector<1x16x4xf32> to vector<16x4xf32>
    %cst_25 = arith.constant dense<0.000000e+00> : vector<16x256xf32>
    %27 = tpu.matmul %26, %24, %cst_25 {dimension_numbers = #tpu.dot_dimension_numbers<[1], [0], [0], [1], [0, 0, 1, 1], [], []>} : vector<16x4xf32>, vector<4x256xf32>, vector<16x256xf32> -> vector<16x256xf32>
    %28 = arith.addf %18, %27 : vector<16x256xf32>
    %c0_26 = arith.constant 0 : index
    %c0_27 = arith.constant 0 : index
    %c16 = arith.constant 16 : index
    %29 = vector.load %arg1[%c0_26, %c0_27, %c16] : memref<1x4x290xf32, #tpu.memory_space<vmem>>, vector<1x4x256xf32>
    %30 = vector.shape_cast %29 : vector<1x4x256xf32> to vector<4x256xf32>
    %c3 = arith.constant 3 : index
    %c0_28 = arith.constant 0 : index
    %c0_29 = arith.constant 0 : index
    %31 = vector.load %arg3[%c3, %c0_28, %c0_29] : memref<9x1x256xf32, #tpu.memory_space<vmem>>, vector<1x1x256xf32>
    %32 = vector.shape_cast %31 : vector<1x1x256xf32> to vector<1x256xf32>
    %33 = vector.broadcast %32 : vector<1x256xf32> to vector<4x256xf32>
    %34 = arith.mulf %30, %33 : vector<4x256xf32>
    %c3_30 = arith.constant 3 : index
    %c0_31 = arith.constant 0 : index
    %c0_32 = arith.constant 0 : index
    %35 = vector.load %arg2[%c3_30, %c0_31, %c0_32] : memref<9x16x4xf32, #tpu.memory_space<vmem>>, vector<1x16x4xf32>
    %36 = vector.shape_cast %35 : vector<1x16x4xf32> to vector<16x4xf32>
    %cst_33 = arith.constant dense<0.000000e+00> : vector<16x256xf32>
    %37 = tpu.matmul %36, %34, %cst_33 {dimension_numbers = #tpu.dot_dimension_numbers<[1], [0], [0], [1], [0, 0, 1, 1], [], []>} : vector<16x4xf32>, vector<4x256xf32>, vector<16x256xf32> -> vector<16x256xf32>
    %38 = arith.addf %28, %37 : vector<16x256xf32>
    %c0_34 = arith.constant 0 : index
    %c0_35 = arith.constant 0 : index
    %c17 = arith.constant 17 : index
    %39 = vector.load %arg1[%c0_34, %c0_35, %c17] : memref<1x4x290xf32, #tpu.memory_space<vmem>>, vector<1x4x256xf32>
    %40 = vector.shape_cast %39 : vector<1x4x256xf32> to vector<4x256xf32>
    %c4 = arith.constant 4 : index
    %c0_36 = arith.constant 0 : index
    %c0_37 = arith.constant 0 : index
    %41 = vector.load %arg2[%c4, %c0_36, %c0_37] : memref<9x16x4xf32, #tpu.memory_space<vmem>>, vector<1x16x4xf32>
    %42 = vector.shape_cast %41 : vector<1x16x4xf32> to vector<16x4xf32>
    %cst_38 = arith.constant dense<0.000000e+00> : vector<16x256xf32>
    %43 = tpu.matmul %42, %40, %cst_38 {dimension_numbers = #tpu.dot_dimension_numbers<[1], [0], [0], [1], [0, 0, 1, 1], [], []>} : vector<16x4xf32>, vector<4x256xf32>, vector<16x256xf32> -> vector<16x256xf32>
    %44 = arith.addf %38, %43 : vector<16x256xf32>
    %c0_39 = arith.constant 0 : index
    %c0_40 = arith.constant 0 : index
    %c18 = arith.constant 18 : index
    %45 = vector.load %arg1[%c0_39, %c0_40, %c18] : memref<1x4x290xf32, #tpu.memory_space<vmem>>, vector<1x4x256xf32>
    %46 = vector.shape_cast %45 : vector<1x4x256xf32> to vector<4x256xf32>
    %c5 = arith.constant 5 : index
    %c0_41 = arith.constant 0 : index
    %c0_42 = arith.constant 0 : index
    %47 = vector.load %arg3[%c5, %c0_41, %c0_42] : memref<9x1x256xf32, #tpu.memory_space<vmem>>, vector<1x1x256xf32>
    %48 = vector.shape_cast %47 : vector<1x1x256xf32> to vector<1x256xf32>
    %49 = vector.broadcast %48 : vector<1x256xf32> to vector<4x256xf32>
    %50 = arith.mulf %46, %49 : vector<4x256xf32>
    %c5_43 = arith.constant 5 : index
    %c0_44 = arith.constant 0 : index
    %c0_45 = arith.constant 0 : index
    %51 = vector.load %arg2[%c5_43, %c0_44, %c0_45] : memref<9x16x4xf32, #tpu.memory_space<vmem>>, vector<1x16x4xf32>
    %52 = vector.shape_cast %51 : vector<1x16x4xf32> to vector<16x4xf32>
    %cst_46 = arith.constant dense<0.000000e+00> : vector<16x256xf32>
    %53 = tpu.matmul %52, %50, %cst_46 {dimension_numbers = #tpu.dot_dimension_numbers<[1], [0], [0], [1], [0, 0, 1, 1], [], []>} : vector<16x4xf32>, vector<4x256xf32>, vector<16x256xf32> -> vector<16x256xf32>
    %54 = arith.addf %44, %53 : vector<16x256xf32>
    %c0_47 = arith.constant 0 : index
    %c0_48 = arith.constant 0 : index
    %c32 = arith.constant 32 : index
    %55 = vector.load %arg1[%c0_47, %c0_48, %c32] : memref<1x4x290xf32, #tpu.memory_space<vmem>>, vector<1x4x256xf32>
    %56 = vector.shape_cast %55 : vector<1x4x256xf32> to vector<4x256xf32>
    %c6 = arith.constant 6 : index
    %c0_49 = arith.constant 0 : index
    %c0_50 = arith.constant 0 : index
    %57 = vector.load %arg3[%c6, %c0_49, %c0_50] : memref<9x1x256xf32, #tpu.memory_space<vmem>>, vector<1x1x256xf32>
    %58 = vector.shape_cast %57 : vector<1x1x256xf32> to vector<1x256xf32>
    %59 = vector.broadcast %58 : vector<1x256xf32> to vector<4x256xf32>
    %60 = arith.mulf %56, %59 : vector<4x256xf32>
    %c6_51 = arith.constant 6 : index
    %c0_52 = arith.constant 0 : index
    %c0_53 = arith.constant 0 : index
    %61 = vector.load %arg2[%c6_51, %c0_52, %c0_53] : memref<9x16x4xf32, #tpu.memory_space<vmem>>, vector<1x16x4xf32>
    %62 = vector.shape_cast %61 : vector<1x16x4xf32> to vector<16x4xf32>
    %cst_54 = arith.constant dense<0.000000e+00> : vector<16x256xf32>
    %63 = tpu.matmul %62, %60, %cst_54 {dimension_numbers = #tpu.dot_dimension_numbers<[1], [0], [0], [1], [0, 0, 1, 1], [], []>} : vector<16x4xf32>, vector<4x256xf32>, vector<16x256xf32> -> vector<16x256xf32>
    %64 = arith.addf %54, %63 : vector<16x256xf32>
    %c0_55 = arith.constant 0 : index
    %c0_56 = arith.constant 0 : index
    %c33 = arith.constant 33 : index
    %65 = vector.load %arg1[%c0_55, %c0_56, %c33] : memref<1x4x290xf32, #tpu.memory_space<vmem>>, vector<1x4x256xf32>
    %66 = vector.shape_cast %65 : vector<1x4x256xf32> to vector<4x256xf32>
    %c7 = arith.constant 7 : index
    %c0_57 = arith.constant 0 : index
    %c0_58 = arith.constant 0 : index
    %67 = vector.load %arg3[%c7, %c0_57, %c0_58] : memref<9x1x256xf32, #tpu.memory_space<vmem>>, vector<1x1x256xf32>
    %68 = vector.shape_cast %67 : vector<1x1x256xf32> to vector<1x256xf32>
    %69 = vector.broadcast %68 : vector<1x256xf32> to vector<4x256xf32>
    %70 = arith.mulf %66, %69 : vector<4x256xf32>
    %c7_59 = arith.constant 7 : index
    %c0_60 = arith.constant 0 : index
    %c0_61 = arith.constant 0 : index
    %71 = vector.load %arg2[%c7_59, %c0_60, %c0_61] : memref<9x16x4xf32, #tpu.memory_space<vmem>>, vector<1x16x4xf32>
    %72 = vector.shape_cast %71 : vector<1x16x4xf32> to vector<16x4xf32>
    %cst_62 = arith.constant dense<0.000000e+00> : vector<16x256xf32>
    %73 = tpu.matmul %72, %70, %cst_62 {dimension_numbers = #tpu.dot_dimension_numbers<[1], [0], [0], [1], [0, 0, 1, 1], [], []>} : vector<16x4xf32>, vector<4x256xf32>, vector<16x256xf32> -> vector<16x256xf32>
    %74 = arith.addf %64, %73 : vector<16x256xf32>
    %c0_63 = arith.constant 0 : index
    %c0_64 = arith.constant 0 : index
    %c34 = arith.constant 34 : index
    %75 = vector.load %arg1[%c0_63, %c0_64, %c34] : memref<1x4x290xf32, #tpu.memory_space<vmem>>, vector<1x4x256xf32>
    %76 = vector.shape_cast %75 : vector<1x4x256xf32> to vector<4x256xf32>
    %c8 = arith.constant 8 : index
    %c0_65 = arith.constant 0 : index
    %c0_66 = arith.constant 0 : index
    %77 = vector.load %arg3[%c8, %c0_65, %c0_66] : memref<9x1x256xf32, #tpu.memory_space<vmem>>, vector<1x1x256xf32>
    %78 = vector.shape_cast %77 : vector<1x1x256xf32> to vector<1x256xf32>
    %79 = vector.broadcast %78 : vector<1x256xf32> to vector<4x256xf32>
    %80 = arith.mulf %76, %79 : vector<4x256xf32>
    %c8_67 = arith.constant 8 : index
    %c0_68 = arith.constant 0 : index
    %c0_69 = arith.constant 0 : index
    %81 = vector.load %arg2[%c8_67, %c0_68, %c0_69] : memref<9x16x4xf32, #tpu.memory_space<vmem>>, vector<1x16x4xf32>
    %82 = vector.shape_cast %81 : vector<1x16x4xf32> to vector<16x4xf32>
    %cst_70 = arith.constant dense<0.000000e+00> : vector<16x256xf32>
    %83 = tpu.matmul %82, %80, %cst_70 {dimension_numbers = #tpu.dot_dimension_numbers<[1], [0], [0], [1], [0, 0, 1, 1], [], []>} : vector<16x4xf32>, vector<4x256xf32>, vector<16x256xf32> -> vector<16x256xf32>
    %84 = arith.addf %74, %83 : vector<16x256xf32>
    %c0_71 = arith.constant 0 : index
    %c0_72 = arith.constant 0 : index
    %85 = vector.load %arg4[%c0_71, %c0_72] : memref<16x1xf32, #tpu.memory_space<vmem>>, vector<16x1xf32>
    %86 = vector.broadcast %85 : vector<16x1xf32> to vector<16x256xf32>
    %87 = arith.mulf %84, %86 : vector<16x256xf32>
    %c0_73 = arith.constant 0 : index
    %c0_74 = arith.constant 0 : index
    %88 = vector.load %arg5[%c0_73, %c0_74] : memref<16x1xf32, #tpu.memory_space<vmem>>, vector<16x1xf32>
    %89 = vector.broadcast %88 : vector<16x1xf32> to vector<16x256xf32>
    %90 = arith.addf %87, %89 : vector<16x256xf32>
    %cst_75 = arith.constant 0.000000e+00 : f32
    %91 = vector.broadcast %cst_75 : f32 to vector<16x256xf32>
    %92 = arith.cmpf ogt, %90, %91 : vector<16x256xf32>
    %cst_76 = arith.constant 0.00999999977 : f32
    %93 = vector.broadcast %cst_76 : f32 to vector<16x256xf32>
    %94 = arith.mulf %93, %90 : vector<16x256xf32>
    %95 = arith.select %92, %90, %94 : vector<16x256xi1>, vector<16x256xf32>
    %c0_77 = arith.constant 0 : index
    %c0_78 = arith.constant 0 : index
    %c0_79 = arith.constant 0 : index
    %96 = vector.load %arg6[%c0_77, %c0_78, %c0_79] : memref<1x16x256xf32, #tpu.memory_space<vmem>>, vector<1x16x256xf32>
    %97 = vector.shape_cast %96 : vector<1x16x256xf32> to vector<16x256xf32>
    %98 = vector.shape_cast %95 : vector<16x256xf32> to vector<1x16x256xf32>
    tpu.vector_store %arg6[%c0_77, %c0_78, %c0_79], %98 {strides = array<i32>} : memref<1x16x256xf32, #tpu.memory_space<vmem>>, vector<1x16x256xf32>,
    return
  }
  func.func @transform_0(%arg0: i32) -> (i32, i32, i32) {
    %c0_i32 = arith.constant 0 : i32
    %c0_i32_0 = arith.constant 0 : i32
    %c0_i32_1 = arith.constant 0 : i32
    return %arg0, %c0_i32, %c0_i32_0 : i32, i32, i32
  }
  func.func @transform_1(%arg0: i32) -> (i32, i32, i32) {
    %c0_i32 = arith.constant 0 : i32
    %c0_i32_0 = arith.constant 0 : i32
    %c0_i32_1 = arith.constant 0 : i32
    %c0_i32_2 = arith.constant 0 : i32
    return %c0_i32, %c0_i32_0, %c0_i32_1 : i32, i32, i32
  }
  func.func @transform_2(%arg0: i32) -> (i32, i32, i32) {
    %c0_i32 = arith.constant 0 : i32
    %c0_i32_0 = arith.constant 0 : i32
    %c0_i32_1 = arith.constant 0 : i32
    %c0_i32_2 = arith.constant 0 : i32
    return %c0_i32, %c0_i32_0, %c0_i32_1 : i32, i32, i32
  }
  func.func @transform_3(%arg0: i32) -> (i32, i32) {
    %c0_i32 = arith.constant 0 : i32
    %c0_i32_0 = arith.constant 0 : i32
    %c0_i32_1 = arith.constant 0 : i32
    return %c0_i32, %c0_i32_0 : i32, i32
  }
  func.func @transform_4(%arg0: i32) -> (i32, i32) {
    %c0_i32 = arith.constant 0 : i32
    %c0_i32_0 = arith.constant 0 : i32
    %c0_i32_1 = arith.constant 0 : i32
    return %c0_i32, %c0_i32_0 : i32, i32
  }
  func.func @transform_5(%arg0: i32) -> (i32, i32, i32) {
    %c0_i32 = arith.constant 0 : i32
    %c0_i32_0 = arith.constant 0 : i32
    %c0_i32_1 = arith.constant 0 : i32
    return %arg0, %c0_i32, %c0_i32_0 : i32, i32, i32
  }
}

</mosaic_0001>

<llo_original>
// kernel: simple_block_forward.2
$region0: #{simple_block_forward.2}
  #allocation0 [shape = 'u32[]', space=smem, size = 0x4, offset = 0x4, fixed_abs, tag = 'smem constant byte address 0x4 - core index']
  #allocation1 [shape = 'u32[72,128]{1,0:T(1,128)}', space=vmem, size = 0x9000, scoped, tag = 'internal scratch']
  %s0 = inlined_call_operand.vmem [shape: f32[2,4,290], index: 0, kind: input, shape index: {}]
  %s1 = inlined_call_operand.vmem [shape: f32[9,16,4], index: 1, kind: input, shape index: {}]
  %s2 = inlined_call_operand.vmem [shape: f32[9,1,256], index: 2, kind: input, shape index: {}]
  %s3 = inlined_call_operand.vmem [shape: f32[2,16,1], index: 3, kind: output, shape index: {0}]
  %s4 = inlined_call_operand.vmem [shape: f32[2,16,1], index: 4, kind: output, shape index: {1}]
  %5 = xla_tuple %s3, %s4
  %s6 = sld [smem:[#allocation0]]
  $region53: #{simple_block_forward.2} parent=0
    _
  %s8 = ssub.s32 1, %s6
  %s9 = scalar_select 0, %s8, %s6
  loop: start=0, step=1, limit=4
  $region2: #{simple_block_forward.2} parent=0 // loop_pre_header
    _
  $region3: #{simple_block_forward.2} parent=0 // loop_header
    %s11 = sphi 0, %s15
    %p12 = scmp.ge.s32.totalorder %s11, 4
    %s21 = sphi 0, %s23
    %s24 = sphi 0, %s21
    %s25 = sphi 0, %s24
    %s41 = sphi 0, %s25
    %s45 = sphi 0, %s45
    %s47 = sphi 0, %s45
    %s48 = sphi 0, %s47
    %s62 = sphi 0, %s48
    %s66 = sphi 0, %s66
    %s68 = sphi 0, %s66
    %s69 = sphi 0, %s68
    %s83 = sphi 0, %s69
    %s89 = sphi 0, %s91
    %s92 = sphi 0, %s89
    %s93 = sphi 0, %s92
    %s109 = sphi 0, %s93
    %s115 = sphi 0, %s117
    %s118 = sphi 0, %s115
    %s119 = sphi 0, %s118
    %s135 = sphi 0, %s119
  $region4: #{simple_block_forward.2} parent=0 // loop_header_branch
    %14 = sbr.rel (%p12) target = $region8
  $region5: #{simple_block_forward.2} parent=0 // loop_body
    %s16 = ssub.s32 %s11, 1
    %s17 = ssub.s32 %s11, 2
    %s18 = sadd.s32 %s11, 1
    %s19 = ssub.s32 %s11, %s18
    %p20 = scmp.eq.s32.totalorder %s19, 0
    %s22 = sadd.s32 %s21, 1
    %s23 = scalar_select %p20, %s21, %s22
    %p26 = pneg %p20
    %p27 = scmp.eq.s32.totalorder %s11, 1
    %p28 = por %p26, %p27
    %p29 = scmp.ne.s32.totalorder %s21, %s24
    %p30 = scmp.eq.s32.totalorder %s11, 0
    %p31 = por %p29, %p30
    %p32 = scmp.ne.s32.totalorder %s21, %s24
    %p33 = scmp.eq.s32.totalorder %s16, 1
    %p34 = por %p32, %p33
    %p35 = scmp.ne.s32.totalorder %s24, %s25
    %p36 = scmp.eq.s32.totalorder %s16, 0
    %p37 = por %p35, %p36
    %p38 = scmp.ne.s32.totalorder %s24, %s25
    %p39 = scmp.eq.s32.totalorder %s17, 1
    %p40 = por %p38, %p39
    %p42 = scmp.ne.s32.totalorder %s25, %s41
    %p43 = scmp.eq.s32.totalorder %s17, 0
    %p44 = por %p42, %p43
    %s46 = sadd.s32 %s45, 1
    %p49 = scmp.eq.s32.totalorder %s11, 1
    %p50 = scmp.ne.s32.totalorder %s45, %s47
    %p51 = scmp.eq.s32.totalorder %s11, 0
    %p52 = por %p50, %p51
    %p53 = scmp.ne.s32.totalorder %s45, %s47
    %p54 = scmp.eq.s32.totalorder %s16, 1
    %p55 = por %p53, %p54
    %p56 = scmp.ne.s32.totalorder %s47, %s48
    %p57 = scmp.eq.s32.totalorder %s16, 0
    %p58 = por %p56, %p57
    %p59 = scmp.ne.s32.totalorder %s47, %s48
    %p60 = scmp.eq.s32.totalorder %s17, 1
    %p61 = por %p59, %p60
    %p63 = scmp.ne.s32.totalorder %s48, %s62
    %p64 = scmp.eq.s32.totalorder %s17, 0
    %p65 = por %p63, %p64
    %s67 = sadd.s32 %s66, 1
    %p70 = scmp.eq.s32.totalorder %s11, 1
    %p71 = scmp.ne.s32.totalorder %s66, %s68
    %p72 = scmp.eq.s32.totalorder %s11, 0
    %p73 = por %p71, %p72
    %p74 = scmp.ne.s32.totalorder %s66, %s68
    %p75 = scmp.eq.s32.totalorder %s16, 1
    %p76 = por %p74, %p75
    %p77 = scmp.ne.s32.totalorder %s68, %s69
    %p78 = scmp.eq.s32.totalorder %s16, 0
    %p79 = por %p77, %p78
    %p80 = scmp.ne.s32.totalorder %s68, %s69
    %p81 = scmp.eq.s32.totalorder %s17, 1
    %p82 = por %p80, %p81
    %p84 = scmp.ne.s32.totalorder %s69, %s83
    %p85 = scmp.eq.s32.totalorder %s17, 0
    %p86 = por %p84, %p85
    %s87 = ssub.s32 %s11, %s18
    %p88 = scmp.eq.s32.totalorder %s87, 0
    %s90 = sadd.s32 %s89, 1
    %s91 = scalar_select %p88, %s89, %s90
    %p94 = pneg %p88
    %p95 = scmp.eq.s32.totalorder %s11, 1
    %p96 = por %p94, %p95
    %p97 = scmp.ne.s32.totalorder %s89, %s92
    %p98 = scmp.eq.s32.totalorder %s11, 0
    %p99 = por %p97, %p98
    %p100 = scmp.ne.s32.totalorder %s89, %s92
    %p101 = scmp.eq.s32.totalorder %s16, 1
    %p102 = por %p100, %p101
    %p103 = scmp.ne.s32.totalorder %s92, %s93
    %p104 = scmp.eq.s32.totalorder %s16, 0
    %p105 = por %p103, %p104
    %p106 = scmp.ne.s32.totalorder %s92, %s93
    %p107 = scmp.eq.s32.totalorder %s17, 1
    %p108 = por %p106, %p107
    %p110 = scmp.ne.s32.totalorder %s93, %s109
    %p111 = scmp.eq.s32.totalorder %s17, 0
    %p112 = por %p110, %p111
    %s113 = ssub.s32 %s11, %s18
    %p114 = scmp.eq.s32.totalorder %s113, 0
    %s116 = sadd.s32 %s115, 1
    %s117 = scalar_select %p114, %s115, %s116
    %p120 = pneg %p114
    %p121 = scmp.eq.s32.totalorder %s11, 1
    %p122 = por %p120, %p121
    %p123 = scmp.ne.s32.totalorder %s115, %s118
    %p124 = scmp.eq.s32.totalorder %s11, 0
    %p125 = por %p123, %p124
    %p126 = scmp.ne.s32.totalorder %s115, %s118
    %p127 = scmp.eq.s32.totalorder %s16, 1
    %p128 = por %p126, %p127
    %p129 = scmp.ne.s32.totalorder %s118, %s119
    %p130 = scmp.eq.s32.totalorder %s16, 0
    %p131 = por %p129, %p130
    %p132 = scmp.ne.s32.totalorder %s118, %s119
    %p133 = scmp.eq.s32.totalorder %s17, 1
    %p134 = por %p132, %p133
    %p136 = scmp.ne.s32.totalorder %s119, %s135
    %p137 = scmp.eq.s32.totalorder %s17, 0
    %p138 = por %p136, %p137
    %p139 = scmp.le.s32.totalorder 1, %s11
    %p140 = scmp.lt.s32.totalorder %s11, 3
    %p141 = pnand %p139, %p140
    %p142 = pneg %p141
    // Predicated region
    $region9: #{simple_block_forward.2} parent=5 // pred_check
      _
    $region10: #{simple_block_forward.2} parent=5 // pred_check_branch
      %144 = sbr.rel (%p141) target = $region12
    $region11: #{simple_block_forward.2} parent=5 // pred_region
      %s145 = ssub.s32 %s11, 1
      // Predicated region
      $region13: #{simple_block_forward.2} parent=11 // pred_check
        %p146 = pneg %p58
      $region14: #{simple_block_forward.2} parent=11 // pred_check_branch
        %148 = sbr.rel (%p146) target = $region16
      $region15: #{simple_block_forward.2} parent=11 // pred_region
        _
      $region16: #{simple_block_forward.2} parent=11 // pred_fallthru
        _
      // Predicated region
      $region17: #{simple_block_forward.2} parent=11 // pred_check
        %p149 = pneg %p79
      $region18: #{simple_block_forward.2} parent=11 // pred_check_branch
        %151 = sbr.rel (%p149) target = $region20
      $region19: #{simple_block_forward.2} parent=11 // pred_region
        _
      $region20: #{simple_block_forward.2} parent=11 // pred_fallthru
        _
    $region12: #{simple_block_forward.2} parent=5 // pred_fallthru
      _
    %p152 = scmp.lt.s32.totalorder %s11, 2
    // Predicated region
    $region21: #{simple_block_forward.2} parent=5 // pred_check
      %p153 = pneg %p152
    $region22: #{simple_block_forward.2} parent=5 // pred_check_branch
      %155 = sbr.rel (%p153) target = $region24
    $region23: #{simple_block_forward.2} parent=5 // pred_region
      // Predicated region
      $region25: #{simple_block_forward.2} parent=23 // pred_check
        %p156 = pneg %p31
      $region26: #{simple_block_forward.2} parent=23 // pred_check_branch
        %158 = sbr.rel (%p156) target = $region28
      $region27: #{simple_block_forward.2} parent=23 // pred_region
        %p159 = scmp.lt.s32.totalorder %s11, 1
        %s160 = scalar_select %p159, %s11, 1
        %s161 = smul.addr %s160, 3
        %s162 = smul.addr %s161, 4
        %s163 = scalar_lea.vmem %s0, %s162
      $region28: #{simple_block_forward.2} parent=23 // pred_fallthru
        _
    $region24: #{simple_block_forward.2} parent=5 // pred_fallthru
      _
    %p164 = scmp.le.s32.totalorder 1, %s11
    %p165 = scmp.lt.s32.totalorder %s11, 3
    %p166 = pnand %p164, %p165
    %p167 = pneg %p166
    // Predicated region
    $region29: #{simple_block_forward.2} parent=5 // pred_check
      _
    $region30: #{simple_block_forward.2} parent=5 // pred_check_branch
      %169 = sbr.rel (%p166) target = $region32
    $region31: #{simple_block_forward.2} parent=5 // pred_region
      %s170 = ssub.s32 %s11, 1
      %p171 = scmp.lt.s32.totalorder %s16, 1
      %s172 = scalar_select %p171, %s16, 1
      %s173 = smul.addr %s172, 3
      %s174 = smul.addr %s173, 4
      %s175 = scalar_lea.vmem %s0, %s174
      %p176 = pneg %p37
      %p177 = pneg %p34
      %p178 = pneg %p58
      %p179 = pneg %p55
      %p180 = pneg %p79
      %p181 = pneg %p76
      %p182 = pneg %p105
      %p183 = pneg %p102
      %p184 = scmp.lt.s32.totalorder %s16, 1
      %s185 = scalar_select %p184, %s16, 1
      %s186 = smul.addr %s185, 2
      %s187 = smul.addr %s186, 8
      %s188 = scalar_lea.vmem %s3, %s187
      %p189 = pneg %p131
      %p190 = pneg %p128
      %p191 = scmp.lt.s32.totalorder %s16, 1
      %s192 = scalar_select %p191, %s16, 1
      %s193 = smul.addr %s192, 2
      %s194 = smul.addr %s193, 8
      %s195 = scalar_lea.vmem %s4, %s194
      %p196 = scmp.lt.s32.totalorder %s16, 1
      %s197 = scalar_select %p196, %s16, 1
      %s198 = smul.addr %s197, 3
      %s199 = smul.addr %s198, 4
      %s200 = scalar_lea.vmem %s0, %s199
      %p201 = scmp.lt.s32.totalorder %s16, 1
      %s202 = scalar_select %p201, %s16, 1
      %s203 = smul.addr %s202, 2
      %s204 = smul.addr %s203, 8
      %s205 = scalar_lea.vmem %s3, %s204
      %p206 = scmp.lt.s32.totalorder %s16, 1
      %s207 = scalar_select %p206, %s16, 1
      %s208 = smul.addr %s207, 2
      %s209 = smul.addr %s208, 8
      %s210 = scalar_lea.vmem %s4, %s209
      %v211 = vld [vmem:[%s200] sm:$0xff]
      %v212 = vld [vmem:[%s2] sm:$0x3]
      %v214 = vperm.slane %v212, 0
      %v215 = vperm.slane %v212, 1
      %v216 = vrot.slane %v215, 4
      %vm217 = vcmask 1043456
      %v218 = vsel %vm217, %v214, %v216
      %v220 = vmul.f32 %v211, %v218
      %v221 = vld [vmem:[%s1] sm:$0xff]
      %v222 = vld [vmem:[%s1 + $0x8] sm:$0xff]
      %v223 = vld [vmem:[%s200 + $0x8] sm:$0xf]
      %s224 = scalar_lea.vmem %s2, 2
      %v225 = vld [vmem:[%s224] sm:$0x3]
      %v227 = vperm.slane %v225, 0
      %v228 = vperm.slane %v225, 1
      %v229 = vrot.slane %v228, 4
      %v230 = vsel %vm217, %v227, %v229
      %231 = vrot.lane.b32.xlu0 %v230, 1
      %v232 = vpop.permute.xlu0 %231
      %v233 = vrot.slane %v232, 4
      %vm234 = vcmask 7168
      %v235 = vsel %vm234, %v233, %v232
      %v238 = vmul.f32 %v211, %v235
      %v239 = vmul.f32 %v223, %v233
      %s240 = scalar_lea.vmem %s1, 16
      %v241 = vld [vmem:[%s240] sm:$0xff]
      %v242 = vld [vmem:[%s240 + $0x8] sm:$0xff]
      %245 = vst [vmem:[#allocation1] ss:$2 sm:$0xff] %v238
      %s246 = scalar_lea.vmem [#allocation1], 16
      %247 = vst [vmem:[%s246] ss:$2 sm:$0xff] %v239
      %v248 = vld.sshfl [vmem:[#allocation1] sm:$0xff pattern:$0x75316420]
      %v249 = vld.sshfl [vmem:[#allocation1 + $0x8] sm:$0xff pattern:$0x75316420]
      %v250 = vld.sshfl [vmem:[#allocation1 + $0x10] sm:$0xff pattern:$0x75316420]
      %251 = vrot.lane.b32.xlu0 %v248, 127
      %v252 = vpop.permute.xlu0 %251
      %253 = vrot.lane.b32.xlu0 %v249, 127
      %v254 = vpop.permute.xlu0 %253
      %255 = vrot.lane.b32.xlu0 %v250, 127
      %v256 = vpop.permute.xlu0 %255
      %vm257 = vcmask 1039360
      %v258 = vsel %vm257, %v252, %v254
      %v259 = vsel %vm257, %v254, %v256
      %vm260 = vcmask 31744
      %v262 = vsel %vm260, %v241, 0
      %v265 = vsel %vm260, %v242, 0
      %v267 = vsel %vm217, %v258, 0
      %v269 = vsel %vm217, %v259, 0
      %271 = vmatpush.msra.mxu0 0.0
      %272 = vmatpush.msra.mxu0 0.0
      %273 = vmatpush.msra.mxu0 0.0
      %274 = vmatpush.msra.mxu0 0.0
      %275 = vmatpush.msra.mxu0 0.0
      %276 = vmatpush.msra.mxu0 0.0
      %277 = vmatpush.msra.mxu0 0.0
      %278 = vmatpush.msra.mxu0 0.0
      %279 = vmatpush.msra.mxu0 0.0
      %280 = vmatpush.msra.mxu0 0.0
      %281 = vmatpush.msra.mxu0 0.0
      %282 = vmatpush.msra.mxu0 0.0
      %283 = vmatpush.msra.mxu0 0.0
      %284 = vmatpush.msra.mxu0 0.0
      %285 = vmatpush.msra.mxu0 0.0
      %286 = vmatpush.msra.mxu0 %v267
      %287 = vmatmul.f32.gmra.mxu0 %v262
      %v288 = vpop.f32.mrf.mxu0
      %v289 = vadd.f32 0.0, %v288
      %290 = vmatmul.f32.gmra.mxu0 %v265
      %v291 = vpop.f32.mrf.mxu0
      %v292 = vadd.f32 0.0, %v291
      %293 = vdwg.mxu0
      %294 = vmatpush.msra.mxu0 0.0
      %295 = vmatpush.msra.mxu0 0.0
      %296 = vmatpush.msra.mxu0 0.0
      %297 = vmatpush.msra.mxu0 0.0
      %298 = vmatpush.msra.mxu0 0.0
      %299 = vmatpush.msra.mxu0 0.0
      %300 = vmatpush.msra.mxu0 0.0
      %301 = vmatpush.msra.mxu0 0.0
      %302 = vmatpush.msra.mxu0 0.0
      %303 = vmatpush.msra.mxu0 0.0
      %304 = vmatpush.msra.mxu0 0.0
      %305 = vmatpush.msra.mxu0 0.0
      %306 = vmatpush.msra.mxu0 0.0
      %307 = vmatpush.msra.mxu0 0.0
      %308 = vmatpush.msra.mxu0 0.0
      %309 = vmatpush.msra.mxu0 %v269
      %310 = vmatmul.f32.gmra.mxu0 %v262
      %v311 = vpop.f32.mrf.mxu0
      %v312 = vadd.f32 0.0, %v311
      %313 = vmatmul.f32.gmra.mxu0 %v265
      %v314 = vpop.f32.mrf.mxu0
      %v315 = vadd.f32 0.0, %v314
      %316 = vdwg.mxu0
      %318 = vst [vmem:[#allocation1] ss:$2 sm:$0xff] %v220
      %v319 = vld.sshfl [vmem:[#allocation1] sm:$0xff pattern:$0x75316420]
      %v320 = vld.sshfl [vmem:[#allocation1 + $0x8] sm:$0xff pattern:$0x75316420]
      %v322 = vsel %vm260, %v221, 0
      %v325 = vsel %vm260, %v222, 0
      %v327 = vsel %vm217, %v319, 0
      %v329 = vsel %vm217, %v320, 0
      %331 = vmatpush.msra.mxu0 0.0
      %332 = vmatpush.msra.mxu0 0.0
      %333 = vmatpush.msra.mxu0 0.0
      %334 = vmatpush.msra.mxu0 0.0
      %335 = vmatpush.msra.mxu0 0.0
      %336 = vmatpush.msra.mxu0 0.0
      %337 = vmatpush.msra.mxu0 0.0
      %338 = vmatpush.msra.mxu0 0.0
      %339 = vmatpush.msra.mxu0 0.0
      %340 = vmatpush.msra.mxu0 0.0
      %341 = vmatpush.msra.mxu0 0.0
      %342 = vmatpush.msra.mxu0 0.0
      %343 = vmatpush.msra.mxu0 0.0
      %344 = vmatpush.msra.mxu0 0.0
      %345 = vmatpush.msra.mxu0 0.0
      %346 = vmatpush.msra.mxu0 %v327
      %347 = vmatmul.f32.gmra.mxu0 %v322
      %v348 = vpop.f32.mrf.mxu0
      %v349 = vadd.f32 %v289, %v348
      %350 = vmatmul.f32.gmra.mxu0 %v325
      %v351 = vpop.f32.mrf.mxu0
      %v352 = vadd.f32 %v292, %v351
      %353 = vdwg.mxu0
      %354 = vmatpush.msra.mxu0 0.0
      %355 = vmatpush.msra.mxu0 0.0
      %356 = vmatpush.msra.mxu0 0.0
      %357 = vmatpush.msra.mxu0 0.0
      %358 = vmatpush.msra.mxu0 0.0
      %359 = vmatpush.msra.mxu0 0.0
      %360 = vmatpush.msra.mxu0 0.0
      %361 = vmatpush.msra.mxu0 0.0
      %362 = vmatpush.msra.mxu0 0.0
      %363 = vmatpush.msra.mxu0 0.0
      %364 = vmatpush.msra.mxu0 0.0
      %365 = vmatpush.msra.mxu0 0.0
      %366 = vmatpush.msra.mxu0 0.0
      %367 = vmatpush.msra.mxu0 0.0
      %368 = vmatpush.msra.mxu0 0.0
      %369 = vmatpush.msra.mxu0 %v329
      %370 = vmatmul.f32.gmra.mxu0 %v322
      %v371 = vpop.f32.mrf.mxu0
      %v372 = vadd.f32 %v312, %v371
      %373 = vmatmul.f32.gmra.mxu0 %v325
      %v374 = vpop.f32.mrf.mxu0
      %v375 = vadd.f32 %v315, %v374
      %376 = vdwg.mxu0
      %v377 = vld [vmem:[%s200] sm:$0xff]
      %v378 = vld [vmem:[%s200 + $0x8] sm:$0xf]
      %s379 = scalar_lea.vmem %s2, 4
      %v380 = vld [vmem:[%s379] sm:$0x3]
      %v382 = vperm.slane %v380, 0
      %v383 = vperm.slane %v380, 1
      %v384 = vrot.slane %v383, 4
      %v385 = vsel %vm217, %v382, %v384
      %386 = vrot.lane.b32.xlu0 %v385, 2
      %v387 = vpop.permute.xlu0 %386
      %v388 = vrot.slane %v387, 4
      %vm389 = vcmask 15360
      %v390 = vsel %vm389, %v388, %v387
      %v393 = vmul.f32 %v377, %v390
      %v394 = vmul.f32 %v378, %v388
      %s395 = scalar_lea.vmem %s1, 32
      %v396 = vld [vmem:[%s395] sm:$0xff]
      %v397 = vld [vmem:[%s395 + $0x8] sm:$0xff]
      %400 = vst [vmem:[#allocation1] ss:$2 sm:$0xff] %v393
      %s401 = scalar_lea.vmem [#allocation1], 16
      %402 = vst [vmem:[%s401] ss:$2 sm:$0xff] %v394
      %v403 = vld.sshfl [vmem:[#allocation1] sm:$0xff pattern:$0x75316420]
      %v404 = vld.sshfl [vmem:[#allocation1 + $0x8] sm:$0xff pattern:$0x75316420]
      %v405 = vld.sshfl [vmem:[#allocation1 + $0x10] sm:$0xff pattern:$0x75316420]
      %406 = vrot.lane.b32.xlu0 %v403, 126
      %v407 = vpop.permute.xlu0 %406
      %408 = vrot.lane.b32.xlu0 %v404, 126
      %v409 = vpop.permute.xlu0 %408
      %410 = vrot.lane.b32.xlu0 %v405, 126
      %v411 = vpop.permute.xlu0 %410
      %vm412 = vcmask 1031168
      %v413 = vsel %vm412, %v407, %v409
      %v414 = vsel %vm412, %v409, %v411
      %v416 = vsel %vm260, %v396, 0
      %v419 = vsel %vm260, %v397, 0
      %v421 = vsel %vm217, %v413, 0
      %v423 = vsel %vm217, %v414, 0
      %425 = vmatpush.msra.mxu0 0.0
      %426 = vmatpush.msra.mxu0 0.0
      %427 = vmatpush.msra.mxu0 0.0
      %428 = vmatpush.msra.mxu0 0.0
      %429 = vmatpush.msra.mxu0 0.0
      %430 = vmatpush.msra.mxu0 0.0
      %431 = vmatpush.msra.mxu0 0.0
      %432 = vmatpush.msra.mxu0 0.0
      %433 = vmatpush.msra.mxu0 0.0
      %434 = vmatpush.msra.mxu0 0.0
      %435 = vmatpush.msra.mxu0 0.0
      %436 = vmatpush.msra.mxu0 0.0
      %437 = vmatpush.msra.mxu0 0.0
      %438 = vmatpush.msra.mxu0 0.0
      %439 = vmatpush.msra.mxu0 0.0
      %440 = vmatpush.msra.mxu0 %v421
      %441 = vmatmul.f32.gmra.mxu0 %v416
      %v442 = vpop.f32.mrf.mxu0
      %v443 = vadd.f32 0.0, %v442
      %444 = vmatmul.f32.gmra.mxu0 %v419
      %v445 = vpop.f32.mrf.mxu0
      %v446 = vadd.f32 0.0, %v445
      %447 = vdwg.mxu0
      %448 = vmatpush.msra.mxu0 0.0
      %449 = vmatpush.msra.mxu0 0.0
      %450 = vmatpush.msra.mxu0 0.0
      %451 = vmatpush.msra.mxu0 0.0
      %452 = vmatpush.msra.mxu0 0.0
      %453 = vmatpush.msra.mxu0 0.0
      %454 = vmatpush.msra.mxu0 0.0
      %455 = vmatpush.msra.mxu0 0.0
      %456 = vmatpush.msra.mxu0 0.0
      %457 = vmatpush.msra.mxu0 0.0
      %458 = vmatpush.msra.mxu0 0.0
      %459 = vmatpush.msra.mxu0 0.0
      %460 = vmatpush.msra.mxu0 0.0
      %461 = vmatpush.msra.mxu0 0.0
      %462 = vmatpush.msra.mxu0 0.0
      %463 = vmatpush.msra.mxu0 %v423
      %464 = vmatmul.f32.gmra.mxu0 %v416
      %v465 = vpop.f32.mrf.mxu0
      %v466 = vadd.f32 0.0, %v465
      %467 = vmatmul.f32.gmra.mxu0 %v419
      %v468 = vpop.f32.mrf.mxu0
      %v469 = vadd.f32 0.0, %v468
      %470 = vdwg.mxu0
      %v471 = vadd.f32 %v349, %v443
      %v472 = vadd.f32 %v372, %v466
      %v473 = vadd.f32 %v352, %v446
      %v474 = vadd.f32 %v375, %v469
      %v475 = vld [vmem:[%s200] sm:$0xff]
      %v476 = vld [vmem:[%s200 + $0x8] sm:$0xf]
      %s477 = scalar_lea.vmem %s2, 6
      %v478 = vld [vmem:[%s477] sm:$0x3]
      %v480 = vperm.slane %v478, 0
      %v481 = vperm.slane %v478, 1
      %v482 = vrot.slane %v481, 4
      %v483 = vsel %vm217, %v480, %v482
      %484 = vrot.lane.b32.xlu0 %v483, 16
      %v485 = vpop.permute.xlu0 %484
      %v486 = vrot.slane %v485, 4
      %vm487 = vcmask 130048
      %v488 = vsel %vm487, %v486, %v485
      %v491 = vmul.f32 %v475, %v488
      %v492 = vmul.f32 %v476, %v486
      %s493 = scalar_lea.vmem %s1, 48
      %v494 = vld [vmem:[%s493] sm:$0xff]
      %v495 = vld [vmem:[%s493 + $0x8] sm:$0xff]
      %498 = vst [vmem:[#allocation1] ss:$2 sm:$0xff] %v491
      %s499 = scalar_lea.vmem [#allocation1], 16
      %500 = vst [vmem:[%s499] ss:$2 sm:$0xff] %v492
      %v501 = vld.sshfl [vmem:[#allocation1] sm:$0xff pattern:$0x75316420]
      %v502 = vld.sshfl [vmem:[#allocation1 + $0x8] sm:$0xff pattern:$0x75316420]
      %v503 = vld.sshfl [vmem:[#allocation1 + $0x10] sm:$0xff pattern:$0x75316420]
      %504 = vrot.lane.b32.xlu0 %v501, 112
      %v505 = vpop.permute.xlu0 %504
      %506 = vrot.lane.b32.xlu0 %v502, 112
      %v507 = vpop.permute.xlu0 %506
      %508 = vrot.lane.b32.xlu0 %v503, 112
      %v509 = vpop.permute.xlu0 %508
      %vm510 = vcmask 916480
      %v511 = vsel %vm510, %v505, %v507
      %v512 = vsel %vm510, %v507, %v509
      %v514 = vsel %vm260, %v494, 0
      %v517 = vsel %vm260, %v495, 0
      %v519 = vsel %vm217, %v511, 0
      %v521 = vsel %vm217, %v512, 0
      %523 = vmatpush.msra.mxu0 0.0
      %524 = vmatpush.msra.mxu0 0.0
      %525 = vmatpush.msra.mxu0 0.0
      %526 = vmatpush.msra.mxu0 0.0
      %527 = vmatpush.msra.mxu0 0.0
      %528 = vmatpush.msra.mxu0 0.0
      %529 = vmatpush.msra.mxu0 0.0
      %530 = vmatpush.msra.mxu0 0.0
      %531 = vmatpush.msra.mxu0 0.0
      %532 = vmatpush.msra.mxu0 0.0
      %533 = vmatpush.msra.mxu0 0.0
      %534 = vmatpush.msra.mxu0 0.0
      %535 = vmatpush.msra.mxu0 0.0
      %536 = vmatpush.msra.mxu0 0.0
      %537 = vmatpush.msra.mxu0 0.0
      %538 = vmatpush.msra.mxu0 %v519
      %539 = vmatmul.f32.gmra.mxu0 %v514
      %v540 = vpop.f32.mrf.mxu0
      %v541 = vadd.f32 0.0, %v540
      %542 = vmatmul.f32.gmra.mxu0 %v517
      %v543 = vpop.f32.mrf.mxu0
      %v544 = vadd.f32 0.0, %v543
      %545 = vdwg.mxu0
      %546 = vmatpush.msra.mxu0 0.0
      %547 = vmatpush.msra.mxu0 0.0
      %548 = vmatpush.msra.mxu0 0.0
      %549 = vmatpush.msra.mxu0 0.0
      %550 = vmatpush.msra.mxu0 0.0
      %551 = vmatpush.msra.mxu0 0.0
      %552 = vmatpush.msra.mxu0 0.0
      %553 = vmatpush.msra.mxu0 0.0
      %554 = vmatpush.msra.mxu0 0.0
      %555 = vmatpush.msra.mxu0 0.0
      %556 = vmatpush.msra.mxu0 0.0
      %557 = vmatpush.msra.mxu0 0.0
      %558 = vmatpush.msra.mxu0 0.0
      %559 = vmatpush.msra.mxu0 0.0
      %560 = vmatpush.msra.mxu0 0.0
      %561 = vmatpush.msra.mxu0 %v521
      %562 = vmatmul.f32.gmra.mxu0 %v514
      %v563 = vpop.f32.mrf.mxu0
      %v564 = vadd.f32 0.0, %v563
      %565 = vmatmul.f32.gmra.mxu0 %v517
      %v566 = vpop.f32.mrf.mxu0
      %v567 = vadd.f32 0.0, %v566
      %568 = vdwg.mxu0
      %v569 = vadd.f32 %v471, %v541
      %v570 = vadd.f32 %v472, %v564
      %v571 = vadd.f32 %v473, %v544
      %v572 = vadd.f32 %v474, %v567
      %v573 = vld [vmem:[%s200] sm:$0xff]
      %v574 = vld [vmem:[%s200 + $0x8] sm:$0xf]
      %s575 = scalar_lea.vmem %s1, 64
      %v576 = vld [vmem:[%s575] sm:$0xff]
      %v577 = vld [vmem:[%s575 + $0x8] sm:$0xff]
      %580 = vst [vmem:[#allocation1] ss:$2 sm:$0xff] %v573
      %s581 = scalar_lea.vmem [#allocation1], 16
      %582 = vst [vmem:[%s581] ss:$2 sm:$0xff] %v574
      %v583 = vld.sshfl [vmem:[#allocation1] sm:$0xff pattern:$0x75316420]
      %v584 = vld.sshfl [vmem:[#allocation1 + $0x8] sm:$0xff pattern:$0x75316420]
      %v585 = vld.sshfl [vmem:[#allocation1 + $0x10] sm:$0xff pattern:$0x75316420]
      %586 = vrot.lane.b32.xlu0 %v583, 111
      %v587 = vpop.permute.xlu0 %586
      %588 = vrot.lane.b32.xlu0 %v584, 111
      %v589 = vpop.permute.xlu0 %588
      %590 = vrot.lane.b32.xlu0 %v585, 111
      %v591 = vpop.permute.xlu0 %590
      %vm592 = vcmask 908288
      %v593 = vsel %vm592, %v587, %v589
      %v594 = vsel %vm592, %v589, %v591
      %v596 = vsel %vm260, %v576, 0
      %v599 = vsel %vm260, %v577, 0
      %v601 = vsel %vm217, %v593, 0
      %v603 = vsel %vm217, %v594, 0
      %605 = vmatpush.msra.mxu0 0.0
      %606 = vmatpush.msra.mxu0 0.0
      %607 = vmatpush.msra.mxu0 0.0
      %608 = vmatpush.msra.mxu0 0.0
      %609 = vmatpush.msra.mxu0 0.0
      %610 = vmatpush.msra.mxu0 0.0
      %611 = vmatpush.msra.mxu0 0.0
      %612 = vmatpush.msra.mxu0 0.0
      %613 = vmatpush.msra.mxu0 0.0
      %614 = vmatpush.msra.mxu0 0.0
      %615 = vmatpush.msra.mxu0 0.0
      %616 = vmatpush.msra.mxu0 0.0
      %617 = vmatpush.msra.mxu0 0.0
      %618 = vmatpush.msra.mxu0 0.0
      %619 = vmatpush.msra.mxu0 0.0
      %620 = vmatpush.msra.mxu0 %v601
      %621 = vmatmul.f32.gmra.mxu0 %v596
      %v622 = vpop.f32.mrf.mxu0
      %v623 = vadd.f32 0.0, %v622
      %624 = vmatmul.f32.gmra.mxu0 %v599
      %v625 = vpop.f32.mrf.mxu0
      %v626 = vadd.f32 0.0, %v625
      %627 = vdwg.mxu0
      %628 = vmatpush.msra.mxu0 0.0
      %629 = vmatpush.msra.mxu0 0.0
      %630 = vmatpush.msra.mxu0 0.0
      %631 = vmatpush.msra.mxu0 0.0
      %632 = vmatpush.msra.mxu0 0.0
      %633 = vmatpush.msra.mxu0 0.0
      %634 = vmatpush.msra.mxu0 0.0
      %635 = vmatpush.msra.mxu0 0.0
      %636 = vmatpush.msra.mxu0 0.0
      %637 = vmatpush.msra.mxu0 0.0
      %638 = vmatpush.msra.mxu0 0.0
      %639 = vmatpush.msra.mxu0 0.0
      %640 = vmatpush.msra.mxu0 0.0
      %641 = vmatpush.msra.mxu0 0.0
      %642 = vmatpush.msra.mxu0 0.0
      %643 = vmatpush.msra.mxu0 %v603
      %644 = vmatmul.f32.gmra.mxu0 %v596
      %v645 = vpop.f32.mrf.mxu0
      %v646 = vadd.f32 0.0, %v645
      %647 = vmatmul.f32.gmra.mxu0 %v599
      %v648 = vpop.f32.mrf.mxu0
      %v649 = vadd.f32 0.0, %v648
      %650 = vdwg.mxu0
      %v651 = vadd.f32 %v569, %v623
      %v652 = vadd.f32 %v570, %v646
      %v653 = vadd.f32 %v571, %v626
      %v654 = vadd.f32 %v572, %v649
      %v655 = vld [vmem:[%s200] sm:$0xff]
      %v656 = vld [vmem:[%s200 + $0x8] sm:$0xf]
      %s657 = scalar_lea.vmem %s2, 10
      %v658 = vld [vmem:[%s657] sm:$0x3]
      %v660 = vperm.slane %v658, 0
      %v661 = vperm.slane %v658, 1
      %v662 = vrot.slane %v661, 4
      %v663 = vsel %vm217, %v660, %v662
      %664 = vrot.lane.b32.xlu0 %v663, 18
      %v665 = vpop.permute.xlu0 %664
      %v666 = vrot.slane %v665, 4
      %vm667 = vcmask 146432
      %v668 = vsel %vm667, %v666, %v665
      %v671 = vmul.f32 %v655, %v668
      %v672 = vmul.f32 %v656, %v666
      %s673 = scalar_lea.vmem %s1, 80
      %v674 = vld [vmem:[%s673] sm:$0xff]
      %v675 = vld [vmem:[%s673 + $0x8] sm:$0xff]
      %678 = vst [vmem:[#allocation1] ss:$2 sm:$0xff] %v671
      %s679 = scalar_lea.vmem [#allocation1], 16
      %680 = vst [vmem:[%s679] ss:$2 sm:$0xff] %v672
      %v681 = vld.sshfl [vmem:[#allocation1] sm:$0xff pattern:$0x75316420]
      %v682 = vld.sshfl [vmem:[#allocation1 + $0x8] sm:$0xff pattern:$0x75316420]
      %v683 = vld.sshfl [vmem:[#allocation1 + $0x10] sm:$0xff pattern:$0x75316420]
      %684 = vrot.lane.b32.xlu0 %v681, 110
      %v685 = vpop.permute.xlu0 %684
      %686 = vrot.lane.b32.xlu0 %v682, 110
      %v687 = vpop.permute.xlu0 %686
      %688 = vrot.lane.b32.xlu0 %v683, 110
      %v689 = vpop.permute.xlu0 %688
      %vm690 = vcmask 900096
      %v691 = vsel %vm690, %v685, %v687
      %v692 = vsel %vm690, %v687, %v689
      %v694 = vsel %vm260, %v674, 0
      %v697 = vsel %vm260, %v675, 0
      %v699 = vsel %vm217, %v691, 0
      %v701 = vsel %vm217, %v692, 0
      %703 = vmatpush.msra.mxu0 0.0
      %704 = vmatpush.msra.mxu0 0.0
      %705 = vmatpush.msra.mxu0 0.0
      %706 = vmatpush.msra.mxu0 0.0
      %707 = vmatpush.msra.mxu0 0.0
      %708 = vmatpush.msra.mxu0 0.0
      %709 = vmatpush.msra.mxu0 0.0
      %710 = vmatpush.msra.mxu0 0.0
      %711 = vmatpush.msra.mxu0 0.0
      %712 = vmatpush.msra.mxu0 0.0
      %713 = vmatpush.msra.mxu0 0.0
      %714 = vmatpush.msra.mxu0 0.0
      %715 = vmatpush.msra.mxu0 0.0
      %716 = vmatpush.msra.mxu0 0.0
      %717 = vmatpush.msra.mxu0 0.0
      %718 = vmatpush.msra.mxu0 %v699
      %719 = vmatmul.f32.gmra.mxu0 %v694
      %v720 = vpop.f32.mrf.mxu0
      %v721 = vadd.f32 0.0, %v720
      %722 = vmatmul.f32.gmra.mxu0 %v697
      %v723 = vpop.f32.mrf.mxu0
      %v724 = vadd.f32 0.0, %v723
      %725 = vdwg.mxu0
      %726 = vmatpush.msra.mxu0 0.0
      %727 = vmatpush.msra.mxu0 0.0
      %728 = vmatpush.msra.mxu0 0.0
      %729 = vmatpush.msra.mxu0 0.0
      %730 = vmatpush.msra.mxu0 0.0
      %731 = vmatpush.msra.mxu0 0.0
      %732 = vmatpush.msra.mxu0 0.0
      %733 = vmatpush.msra.mxu0 0.0
      %734 = vmatpush.msra.mxu0 0.0
      %735 = vmatpush.msra.mxu0 0.0
      %736 = vmatpush.msra.mxu0 0.0
      %737 = vmatpush.msra.mxu0 0.0
      %738 = vmatpush.msra.mxu0 0.0
      %739 = vmatpush.msra.mxu0 0.0
      %740 = vmatpush.msra.mxu0 0.0
      %741 = vmatpush.msra.mxu0 %v701
      %742 = vmatmul.f32.gmra.mxu0 %v694
      %v743 = vpop.f32.mrf.mxu0
      %v744 = vadd.f32 0.0, %v743
      %745 = vmatmul.f32.gmra.mxu0 %v697
      %v746 = vpop.f32.mrf.mxu0
      %v747 = vadd.f32 0.0, %v746
      %748 = vdwg.mxu0
      %v749 = vadd.f32 %v651, %v721
      %v750 = vadd.f32 %v652, %v744
      %v751 = vadd.f32 %v653, %v724
      %v752 = vadd.f32 %v654, %v747
      %v753 = vld [vmem:[%s200] sm:$0xff]
      %v754 = vld [vmem:[%s200 + $0x8] sm:$0xf]
      %s755 = scalar_lea.vmem %s2, 12
      %v756 = vld [vmem:[%s755] sm:$0x3]
      %v758 = vperm.slane %v756, 0
      %v759 = vperm.slane %v756, 1
      %v760 = vrot.slane %v759, 4
      %v761 = vsel %vm217, %v758, %v760
      %762 = vrot.lane.b32.xlu0 %v761, 32
      %v763 = vpop.permute.xlu0 %762
      %v764 = vrot.slane %v763, 4
      %vm765 = vcmask 261120
      %v766 = vsel %vm765, %v764, %v763
      %v769 = vmul.f32 %v753, %v766
      %v770 = vmul.f32 %v754, %v764
      %s771 = scalar_lea.vmem %s1, 96
      %v772 = vld [vmem:[%s771] sm:$0xff]
      %v773 = vld [vmem:[%s771 + $0x8] sm:$0xff]
      %776 = vst [vmem:[#allocation1] ss:$2 sm:$0xff] %v769
      %s777 = scalar_lea.vmem [#allocation1], 16
      %778 = vst [vmem:[%s777] ss:$2 sm:$0xff] %v770
      %v779 = vld.sshfl [vmem:[#allocation1] sm:$0xff pattern:$0x75316420]
      %v780 = vld.sshfl [vmem:[#allocation1 + $0x8] sm:$0xff pattern:$0x75316420]
      %v781 = vld.sshfl [vmem:[#allocation1 + $0x10] sm:$0xff pattern:$0x75316420]
      %782 = vrot.lane.b32.xlu0 %v779, 96
      %v783 = vpop.permute.xlu0 %782
      %784 = vrot.lane.b32.xlu0 %v780, 96
      %v785 = vpop.permute.xlu0 %784
      %786 = vrot.lane.b32.xlu0 %v781, 96
      %v787 = vpop.permute.xlu0 %786
      %vm788 = vcmask 785408
      %v789 = vsel %vm788, %v783, %v785
      %v790 = vsel %vm788, %v785, %v787
      %v792 = vsel %vm260, %v772, 0
      %v795 = vsel %vm260, %v773, 0
      %v797 = vsel %vm217, %v789, 0
      %v799 = vsel %vm217, %v790, 0
      %801 = vmatpush.msra.mxu0 0.0
      %802 = vmatpush.msra.mxu0 0.0
      %803 = vmatpush.msra.mxu0 0.0
      %804 = vmatpush.msra.mxu0 0.0
      %805 = vmatpush.msra.mxu0 0.0
      %806 = vmatpush.msra.mxu0 0.0
      %807 = vmatpush.msra.mxu0 0.0
      %808 = vmatpush.msra.mxu0 0.0
      %809 = vmatpush.msra.mxu0 0.0
      %810 = vmatpush.msra.mxu0 0.0
      %811 = vmatpush.msra.mxu0 0.0
      %812 = vmatpush.msra.mxu0 0.0
      %813 = vmatpush.msra.mxu0 0.0
      %814 = vmatpush.msra.mxu0 0.0
      %815 = vmatpush.msra.mxu0 0.0
      %816 = vmatpush.msra.mxu0 %v797
      %817 = vmatmul.f32.gmra.mxu0 %v792
      %v818 = vpop.f32.mrf.mxu0
      %v819 = vadd.f32 0.0, %v818
      %820 = vmatmul.f32.gmra.mxu0 %v795
      %v821 = vpop.f32.mrf.mxu0
      %v822 = vadd.f32 0.0, %v821
      %823 = vdwg.mxu0
      %824 = vmatpush.msra.mxu0 0.0
      %825 = vmatpush.msra.mxu0 0.0
      %826 = vmatpush.msra.mxu0 0.0
      %827 = vmatpush.msra.mxu0 0.0
      %828 = vmatpush.msra.mxu0 0.0
      %829 = vmatpush.msra.mxu0 0.0
      %830 = vmatpush.msra.mxu0 0.0
      %831 = vmatpush.msra.mxu0 0.0
      %832 = vmatpush.msra.mxu0 0.0
      %833 = vmatpush.msra.mxu0 0.0
      %834 = vmatpush.msra.mxu0 0.0
      %835 = vmatpush.msra.mxu0 0.0
      %836 = vmatpush.msra.mxu0 0.0
      %837 = vmatpush.msra.mxu0 0.0
      %838 = vmatpush.msra.mxu0 0.0
      %839 = vmatpush.msra.mxu0 %v799
      %840 = vmatmul.f32.gmra.mxu0 %v792
      %v841 = vpop.f32.mrf.mxu0
      %v842 = vadd.f32 0.0, %v841
      %843 = vmatmul.f32.gmra.mxu0 %v795
      %v844 = vpop.f32.mrf.mxu0
      %v845 = vadd.f32 0.0, %v844
      %846 = vdwg.mxu0
      %v847 = vadd.f32 %v749, %v819
      %v848 = vadd.f32 %v750, %v842
      %v849 = vadd.f32 %v751, %v822
      %v850 = vadd.f32 %v752, %v845
      %v851 = vld [vmem:[%s200] sm:$0xff]
      %v852 = vld [vmem:[%s200 + $0x8] sm:$0xf]
      %s853 = scalar_lea.vmem %s2, 14
      %v854 = vld [vmem:[%s853] sm:$0x3]
      %v856 = vperm.slane %v854, 0
      %v857 = vperm.slane %v854, 1
      %v858 = vrot.slane %v857, 4
      %v859 = vsel %vm217, %v856, %v858
      %860 = vrot.lane.b32.xlu0 %v859, 33
      %v861 = vpop.permute.xlu0 %860
      %v862 = vrot.slane %v861, 4
      %vm863 = vcmask 269312
      %v864 = vsel %vm863, %v862, %v861
      %v867 = vmul.f32 %v851, %v864
      %v868 = vmul.f32 %v852, %v862
      %s869 = scalar_lea.vmem %s1, 112
      %v870 = vld [vmem:[%s869] sm:$0xff]
      %v871 = vld [vmem:[%s869 + $0x8] sm:$0xff]
      %874 = vst [vmem:[#allocation1] ss:$2 sm:$0xff] %v867
      %s875 = scalar_lea.vmem [#allocation1], 16
      %876 = vst [vmem:[%s875] ss:$2 sm:$0xff] %v868
      %v877 = vld.sshfl [vmem:[#allocation1] sm:$0xff pattern:$0x75316420]
      %v878 = vld.sshfl [vmem:[#allocation1 + $0x8] sm:$0xff pattern:$0x75316420]
      %v879 = vld.sshfl [vmem:[#allocation1 + $0x10] sm:$0xff pattern:$0x75316420]
      %880 = vrot.lane.b32.xlu0 %v877, 95
      %v881 = vpop.permute.xlu0 %880
      %882 = vrot.lane.b32.xlu0 %v878, 95
      %v883 = vpop.permute.xlu0 %882
      %884 = vrot.lane.b32.xlu0 %v879, 95
      %v885 = vpop.permute.xlu0 %884
      %vm886 = vcmask 777216
      %v887 = vsel %vm886, %v881, %v883
      %v888 = vsel %vm886, %v883, %v885
      %v890 = vsel %vm260, %v870, 0
      %v893 = vsel %vm260, %v871, 0
      %v895 = vsel %vm217, %v887, 0
      %v897 = vsel %vm217, %v888, 0
      %899 = vmatpush.msra.mxu0 0.0
      %900 = vmatpush.msra.mxu0 0.0
      %901 = vmatpush.msra.mxu0 0.0
      %902 = vmatpush.msra.mxu0 0.0
      %903 = vmatpush.msra.mxu0 0.0
      %904 = vmatpush.msra.mxu0 0.0
      %905 = vmatpush.msra.mxu0 0.0
      %906 = vmatpush.msra.mxu0 0.0
      %907 = vmatpush.msra.mxu0 0.0
      %908 = vmatpush.msra.mxu0 0.0
      %909 = vmatpush.msra.mxu0 0.0
      %910 = vmatpush.msra.mxu0 0.0
      %911 = vmatpush.msra.mxu0 0.0
      %912 = vmatpush.msra.mxu0 0.0
      %913 = vmatpush.msra.mxu0 0.0
      %914 = vmatpush.msra.mxu0 %v895
      %915 = vmatmul.f32.gmra.mxu0 %v890
      %v916 = vpop.f32.mrf.mxu0
      %v917 = vadd.f32 0.0, %v916
      %918 = vmatmul.f32.gmra.mxu0 %v893
      %v919 = vpop.f32.mrf.mxu0
      %v920 = vadd.f32 0.0, %v919
      %921 = vdwg.mxu0
      %922 = vmatpush.msra.mxu0 0.0
      %923 = vmatpush.msra.mxu0 0.0
      %924 = vmatpush.msra.mxu0 0.0
      %925 = vmatpush.msra.mxu0 0.0
      %926 = vmatpush.msra.mxu0 0.0
      %927 = vmatpush.msra.mxu0 0.0
      %928 = vmatpush.msra.mxu0 0.0
      %929 = vmatpush.msra.mxu0 0.0
      %930 = vmatpush.msra.mxu0 0.0
      %931 = vmatpush.msra.mxu0 0.0
      %932 = vmatpush.msra.mxu0 0.0
      %933 = vmatpush.msra.mxu0 0.0
      %934 = vmatpush.msra.mxu0 0.0
      %935 = vmatpush.msra.mxu0 0.0
      %936 = vmatpush.msra.mxu0 0.0
      %937 = vmatpush.msra.mxu0 %v897
      %938 = vmatmul.f32.gmra.mxu0 %v890
      %v939 = vpop.f32.mrf.mxu0
      %v940 = vadd.f32 0.0, %v939
      %941 = vmatmul.f32.gmra.mxu0 %v893
      %v942 = vpop.f32.mrf.mxu0
      %v943 = vadd.f32 0.0, %v942
      %944 = vdwg.mxu0
      %v945 = vadd.f32 %v847, %v917
      %v946 = vadd.f32 %v848, %v940
      %v947 = vadd.f32 %v849, %v920
      %v948 = vadd.f32 %v850, %v943
      %v949 = vld [vmem:[%s200] sm:$0xff]
      %v950 = vld [vmem:[%s200 + $0x8] sm:$0xf]
      %s951 = scalar_lea.vmem %s2, 16
      %v952 = vld [vmem:[%s951] sm:$0x3]
      %v954 = vperm.slane %v952, 0
      %v955 = vperm.slane %v952, 1
      %v956 = vrot.slane %v955, 4
      %v957 = vsel %vm217, %v954, %v956
      %958 = vrot.lane.b32.xlu0 %v957, 34
      %v959 = vpop.permute.xlu0 %958
      %v960 = vrot.slane %v959, 4
      %vm961 = vcmask 277504
      %v962 = vsel %vm961, %v960, %v959
      %v965 = vmul.f32 %v949, %v962
      %v966 = vmul.f32 %v950, %v960
      %s967 = scalar_lea.vmem %s1, 128
      %v968 = vld [vmem:[%s967] sm:$0xff]
      %v969 = vld [vmem:[%s967 + $0x8] sm:$0xff]
      %972 = vst [vmem:[#allocation1] ss:$2 sm:$0xff] %v965
      %s973 = scalar_lea.vmem [#allocation1], 16
      %974 = vst [vmem:[%s973] ss:$2 sm:$0xff] %v966
      %v975 = vld.sshfl [vmem:[#allocation1] sm:$0xff pattern:$0x75316420]
      %v976 = vld.sshfl [vmem:[#allocation1 + $0x8] sm:$0xff pattern:$0x75316420]
      %v977 = vld.sshfl [vmem:[#allocation1 + $0x10] sm:$0xff pattern:$0x75316420]
      %978 = vrot.lane.b32.xlu0 %v975, 94
      %v979 = vpop.permute.xlu0 %978
      %980 = vrot.lane.b32.xlu0 %v976, 94
      %v981 = vpop.permute.xlu0 %980
      %982 = vrot.lane.b32.xlu0 %v977, 94
      %v983 = vpop.permute.xlu0 %982
      %vm984 = vcmask 769024
      %v985 = vsel %vm984, %v979, %v981
      %v986 = vsel %vm984, %v981, %v983
      %v988 = vsel %vm260, %v968, 0
      %v991 = vsel %vm260, %v969, 0
      %v993 = vsel %vm217, %v985, 0
      %v995 = vsel %vm217, %v986, 0
      %997 = vmatpush.msra.mxu0 0.0
      %998 = vmatpush.msra.mxu0 0.0
      %999 = vmatpush.msra.mxu0 0.0
      %1000 = vmatpush.msra.mxu0 0.0
      %1001 = vmatpush.msra.mxu0 0.0
      %1002 = vmatpush.msra.mxu0 0.0
      %1003 = vmatpush.msra.mxu0 0.0
      %1004 = vmatpush.msra.mxu0 0.0
      %1005 = vmatpush.msra.mxu0 0.0
      %1006 = vmatpush.msra.mxu0 0.0
      %1007 = vmatpush.msra.mxu0 0.0
      %1008 = vmatpush.msra.mxu0 0.0
      %1009 = vmatpush.msra.mxu0 0.0
      %1010 = vmatpush.msra.mxu0 0.0
      %1011 = vmatpush.msra.mxu0 0.0
      %1012 = vmatpush.msra.mxu0 %v993
      %1013 = vmatmul.f32.gmra.mxu0 %v988
      %v1014 = vpop.f32.mrf.mxu0
      %v1015 = vadd.f32 0.0, %v1014
      %1016 = vmatmul.f32.gmra.mxu0 %v991
      %v1017 = vpop.f32.mrf.mxu0
      %v1018 = vadd.f32 0.0, %v1017
      %1019 = vdwg.mxu0
      %1020 = vmatpush.msra.mxu0 0.0
      %1021 = vmatpush.msra.mxu0 0.0
      %1022 = vmatpush.msra.mxu0 0.0
      %1023 = vmatpush.msra.mxu0 0.0
      %1024 = vmatpush.msra.mxu0 0.0
      %1025 = vmatpush.msra.mxu0 0.0
      %1026 = vmatpush.msra.mxu0 0.0
      %1027 = vmatpush.msra.mxu0 0.0
      %1028 = vmatpush.msra.mxu0 0.0
      %1029 = vmatpush.msra.mxu0 0.0
      %1030 = vmatpush.msra.mxu0 0.0
      %1031 = vmatpush.msra.mxu0 0.0
      %1032 = vmatpush.msra.mxu0 0.0
      %1033 = vmatpush.msra.mxu0 0.0
      %1034 = vmatpush.msra.mxu0 0.0
      %1035 = vmatpush.msra.mxu0 %v995
      %1036 = vmatmul.f32.gmra.mxu0 %v988
      %v1037 = vpop.f32.mrf.mxu0
      %v1038 = vadd.f32 0.0, %v1037
      %1039 = vmatmul.f32.gmra.mxu0 %v991
      %v1040 = vpop.f32.mrf.mxu0
      %v1041 = vadd.f32 0.0, %v1040
      %1042 = vdwg.mxu0
      %v1043 = vadd.f32 %v945, %v1015
      %v1044 = vadd.f32 %v946, %v1038
      %v1045 = vadd.f32 %v947, %v1018
      %v1046 = vadd.f32 %v948, %v1041
      %v1047 = vadd.f32 %v1043, %v1044
      %1048 = vadd.xlane.f32.xlu0 %v1047
      %v1049 = vpop.xlane.xlu0 %1048
      %v1050 = vadd.f32 %v1045, %v1046
      %1051 = vadd.xlane.f32.xlu0 %v1050
      %v1052 = vpop.xlane.xlu0 %1051
      %1053 = vst.msk [vmem:[%s205] sm:$0xff] %vm234, %v1049
      %1054 = vst.msk [vmem:[%s205 + $0x8] sm:$0xff] %vm234, %v1052
      %v1055 = vmul.f32 %v1043, %v1043
      %v1056 = vmul.f32 %v1044, %v1044
      %v1057 = vmul.f32 %v1045, %v1045
      %v1058 = vmul.f32 %v1046, %v1046
      %v1059 = vadd.f32 %v1055, %v1056
      %1060 = vadd.xlane.f32.xlu0 %v1059
      %v1061 = vpop.xlane.xlu0 %1060
      %v1062 = vadd.f32 %v1057, %v1058
      %1063 = vadd.xlane.f32.xlu0 %v1062
      %v1064 = vpop.xlane.xlu0 %1063
      %1065 = vst.msk [vmem:[%s210] sm:$0xff] %vm234, %v1061
      %1066 = vst.msk [vmem:[%s210 + $0x8] sm:$0xff] %vm234, %v1064
      %p1067 = scmp.lt.s32.totalorder %s16, 1
      %s1068 = scalar_select %p1067, %s16, 1
      %s1069 = smul.addr %s1068, 2
      %s1070 = smul.addr %s1069, 8
      %s1071 = scalar_lea.vmem %s3, %s1070
      %p1072 = scmp.lt.s32.totalorder %s16, 1
      %s1073 = scalar_select %p1072, %s16, 1
      %s1074 = smul.addr %s1073, 2
      %s1075 = smul.addr %s1074, 8
      %s1076 = scalar_lea.vmem %s4, %s1075
      // Predicated region
      $region33: #{simple_block_forward.2} parent=31 // pred_check
        %p1077 = pneg %p102
      $region34: #{simple_block_forward.2} parent=31 // pred_check_branch
        %1079 = sbr.rel (%p1077) target = $region36
      $region35: #{simple_block_forward.2} parent=31 // pred_region
        _
      $region36: #{simple_block_forward.2} parent=31 // pred_fallthru
        _
      // Predicated region
      $region37: #{simple_block_forward.2} parent=31 // pred_check
        %p1080 = pneg %p128
      $region38: #{simple_block_forward.2} parent=31 // pred_check_branch
        %1082 = sbr.rel (%p1080) target = $region40
      $region39: #{simple_block_forward.2} parent=31 // pred_region
        _
      $region40: #{simple_block_forward.2} parent=31 // pred_fallthru
        _
    $region32: #{simple_block_forward.2} parent=5 // pred_fallthru
      _
    %p1083 = scmp.le.s32.totalorder 2, %s11
    // Predicated region
    $region41: #{simple_block_forward.2} parent=5 // pred_check
      %p1084 = pneg %p1083
    $region42: #{simple_block_forward.2} parent=5 // pred_check_branch
      %1086 = sbr.rel (%p1084) target = $region44
    $region43: #{simple_block_forward.2} parent=5 // pred_region
      %s1087 = ssub.s32 %s11, 2
      // Predicated region
      $region45: #{simple_block_forward.2} parent=43 // pred_check
        %p1088 = pneg %p108
      $region46: #{simple_block_forward.2} parent=43 // pred_check_branch
        %1090 = sbr.rel (%p1088) target = $region48
      $region47: #{simple_block_forward.2} parent=43 // pred_region
        %p1091 = scmp.lt.s32.totalorder %s17, 1
        %s1092 = scalar_select %p1091, %s17, 1
        %s1093 = smul.addr %s1092, 2
        %s1094 = smul.addr %s1093, 8
        %s1095 = scalar_lea.vmem %s3, %s1094
      $region48: #{simple_block_forward.2} parent=43 // pred_fallthru
        _
      // Predicated region
      $region49: #{simple_block_forward.2} parent=43 // pred_check
        %p1096 = pneg %p134
      $region50: #{simple_block_forward.2} parent=43 // pred_check_branch
        %1098 = sbr.rel (%p1096) target = $region52
      $region51: #{simple_block_forward.2} parent=43 // pred_region
        %p1099 = scmp.lt.s32.totalorder %s17, 1
        %s1100 = scalar_select %p1099, %s17, 1
        %s1101 = smul.addr %s1100, 2
        %s1102 = smul.addr %s1101, 8
        %s1103 = scalar_lea.vmem %s4, %s1102
      $region52: #{simple_block_forward.2} parent=43 // pred_fallthru
        _
    $region44: #{simple_block_forward.2} parent=5 // pred_fallthru
      _
  $region6: #{simple_block_forward.2} parent=0 // loop_footer
    %s15 = sadd.s32 1, %s11
  $region7: #{simple_block_forward.2} parent=0 // loop_footer_branch
    %10 = sbr.rel target = $region3
  $region8: #{simple_block_forward.2} parent=0 // loop_exit
    _

// kernel: simple_block_forward.3
$region0: #{simple_block_forward.3}
  #allocation0 [shape = 'u32[]', space=smem, size = 0x4, offset = 0x4, fixed_abs, tag = 'smem constant byte address 0x4 - core index']
  #allocation1 [shape = 'u32[72,128]{1,0:T(1,128)}', space=vmem, size = 0x9000, scoped, tag = 'internal scratch']
  %s0 = inlined_call_operand.vmem [shape: f32[2,4,290], index: 0, kind: input, shape index: {}]
  %s1 = inlined_call_operand.vmem [shape: f32[9,16,4], index: 1, kind: input, shape index: {}]
  %s2 = inlined_call_operand.vmem [shape: f32[9,1,256], index: 2, kind: input, shape index: {}]
  %s3 = inlined_call_operand.vmem [shape: f32[16,1], index: 3, kind: input, shape index: {}]
  %s4 = inlined_call_operand.vmem [shape: f32[16,1], index: 4, kind: input, shape index: {}]
  %s5 = inlined_call_operand.vmem [shape: f32[2,16,256], index: 5, kind: output, shape index: {}]
  %s6 = sld [smem:[#allocation0]]
  $region53: #{simple_block_forward.3} parent=0
    _
  %s8 = ssub.s32 1, %s6
  %s9 = scalar_select 0, %s8, %s6
  loop: start=0, step=1, limit=4
  $region2: #{simple_block_forward.3} parent=0 // loop_pre_header
    _
  $region3: #{simple_block_forward.3} parent=0 // loop_header
    %s11 = sphi 0, %s15
    %p12 = scmp.ge.s32.totalorder %s11, 4
    %s21 = sphi 0, %s23
    %s24 = sphi 0, %s21
    %s25 = sphi 0, %s24
    %s41 = sphi 0, %s25
    %s45 = sphi 0, %s45
    %s47 = sphi 0, %s45
    %s48 = sphi 0, %s47
    %s62 = sphi 0, %s48
    %s66 = sphi 0, %s66
    %s68 = sphi 0, %s66
    %s69 = sphi 0, %s68
    %s83 = sphi 0, %s69
    %s87 = sphi 0, %s87
    %s89 = sphi 0, %s87
    %s90 = sphi 0, %s89
    %s104 = sphi 0, %s90
    %s108 = sphi 0, %s108
    %s110 = sphi 0, %s108
    %s111 = sphi 0, %s110
    %s125 = sphi 0, %s111
    %s131 = sphi 0, %s133
    %s134 = sphi 0, %s131
    %s135 = sphi 0, %s134
    %s151 = sphi 0, %s135
  $region4: #{simple_block_forward.3} parent=0 // loop_header_branch
    %14 = sbr.rel (%p12) target = $region8
  $region5: #{simple_block_forward.3} parent=0 // loop_body
    %s16 = ssub.s32 %s11, 1
    %s17 = ssub.s32 %s11, 2
    %s18 = sadd.s32 %s11, 1
    %s19 = ssub.s32 %s11, %s18
    %p20 = scmp.eq.s32.totalorder %s19, 0
    %s22 = sadd.s32 %s21, 1
    %s23 = scalar_select %p20, %s21, %s22
    %p26 = pneg %p20
    %p27 = scmp.eq.s32.totalorder %s11, 1
    %p28 = por %p26, %p27
    %p29 = scmp.ne.s32.totalorder %s21, %s24
    %p30 = scmp.eq.s32.totalorder %s11, 0
    %p31 = por %p29, %p30
    %p32 = scmp.ne.s32.totalorder %s21, %s24
    %p33 = scmp.eq.s32.totalorder %s16, 1
    %p34 = por %p32, %p33
    %p35 = scmp.ne.s32.totalorder %s24, %s25
    %p36 = scmp.eq.s32.totalorder %s16, 0
    %p37 = por %p35, %p36
    %p38 = scmp.ne.s32.totalorder %s24, %s25
    %p39 = scmp.eq.s32.totalorder %s17, 1
    %p40 = por %p38, %p39
    %p42 = scmp.ne.s32.totalorder %s25, %s41
    %p43 = scmp.eq.s32.totalorder %s17, 0
    %p44 = por %p42, %p43
    %s46 = sadd.s32 %s45, 1
    %p49 = scmp.eq.s32.totalorder %s11, 1
    %p50 = scmp.ne.s32.totalorder %s45, %s47
    %p51 = scmp.eq.s32.totalorder %s11, 0
    %p52 = por %p50, %p51
    %p53 = scmp.ne.s32.totalorder %s45, %s47
    %p54 = scmp.eq.s32.totalorder %s16, 1
    %p55 = por %p53, %p54
    %p56 = scmp.ne.s32.totalorder %s47, %s48
    %p57 = scmp.eq.s32.totalorder %s16, 0
    %p58 = por %p56, %p57
    %p59 = scmp.ne.s32.totalorder %s47, %s48
    %p60 = scmp.eq.s32.totalorder %s17, 1
    %p61 = por %p59, %p60
    %p63 = scmp.ne.s32.totalorder %s48, %s62
    %p64 = scmp.eq.s32.totalorder %s17, 0
    %p65 = por %p63, %p64
    %s67 = sadd.s32 %s66, 1
    %p70 = scmp.eq.s32.totalorder %s11, 1
    %p71 = scmp.ne.s32.totalorder %s66, %s68
    %p72 = scmp.eq.s32.totalorder %s11, 0
    %p73 = por %p71, %p72
    %p74 = scmp.ne.s32.totalorder %s66, %s68
    %p75 = scmp.eq.s32.totalorder %s16, 1
    %p76 = por %p74, %p75
    %p77 = scmp.ne.s32.totalorder %s68, %s69
    %p78 = scmp.eq.s32.totalorder %s16, 0
    %p79 = por %p77, %p78
    %p80 = scmp.ne.s32.totalorder %s68, %s69
    %p81 = scmp.eq.s32.totalorder %s17, 1
    %p82 = por %p80, %p81
    %p84 = scmp.ne.s32.totalorder %s69, %s83
    %p85 = scmp.eq.s32.totalorder %s17, 0
    %p86 = por %p84, %p85
    %s88 = sadd.s32 %s87, 1
    %p91 = scmp.eq.s32.totalorder %s11, 1
    %p92 = scmp.ne.s32.totalorder %s87, %s89
    %p93 = scmp.eq.s32.totalorder %s11, 0
    %p94 = por %p92, %p93
    %p95 = scmp.ne.s32.totalorder %s87, %s89
    %p96 = scmp.eq.s32.totalorder %s16, 1
    %p97 = por %p95, %p96
    %p98 = scmp.ne.s32.totalorder %s89, %s90
    %p99 = scmp.eq.s32.totalorder %s16, 0
    %p100 = por %p98, %p99
    %p101 = scmp.ne.s32.totalorder %s89, %s90
    %p102 = scmp.eq.s32.totalorder %s17, 1
    %p103 = por %p101, %p102
    %p105 = scmp.ne.s32.totalorder %s90, %s104
    %p106 = scmp.eq.s32.totalorder %s17, 0
    %p107 = por %p105, %p106
    %s109 = sadd.s32 %s108, 1
    %p112 = scmp.eq.s32.totalorder %s11, 1
    %p113 = scmp.ne.s32.totalorder %s108, %s110
    %p114 = scmp.eq.s32.totalorder %s11, 0
    %p115 = por %p113, %p114
    %p116 = scmp.ne.s32.totalorder %s108, %s110
    %p117 = scmp.eq.s32.totalorder %s16, 1
    %p118 = por %p116, %p117
    %p119 = scmp.ne.s32.totalorder %s110, %s111
    %p120 = scmp.eq.s32.totalorder %s16, 0
    %p121 = por %p119, %p120
    %p122 = scmp.ne.s32.totalorder %s110, %s111
    %p123 = scmp.eq.s32.totalorder %s17, 1
    %p124 = por %p122, %p123
    %p126 = scmp.ne.s32.totalorder %s111, %s125
    %p127 = scmp.eq.s32.totalorder %s17, 0
    %p128 = por %p126, %p127
    %s129 = ssub.s32 %s11, %s18
    %p130 = scmp.eq.s32.totalorder %s129, 0
    %s132 = sadd.s32 %s131, 1
    %s133 = scalar_select %p130, %s131, %s132
    %p136 = pneg %p130
    %p137 = scmp.eq.s32.totalorder %s11, 1
    %p138 = por %p136, %p137
    %p139 = scmp.ne.s32.totalorder %s131, %s134
    %p140 = scmp.eq.s32.totalorder %s11, 0
    %p141 = por %p139, %p140
    %p142 = scmp.ne.s32.totalorder %s131, %s134
    %p143 = scmp.eq.s32.totalorder %s16, 1
    %p144 = por %p142, %p143
    %p145 = scmp.ne.s32.totalorder %s134, %s135
    %p146 = scmp.eq.s32.totalorder %s16, 0
    %p147 = por %p145, %p146
    %p148 = scmp.ne.s32.totalorder %s134, %s135
    %p149 = scmp.eq.s32.totalorder %s17, 1
    %p150 = por %p148, %p149
    %p152 = scmp.ne.s32.totalorder %s135, %s151
    %p153 = scmp.eq.s32.totalorder %s17, 0
    %p154 = por %p152, %p153
    %p155 = scmp.le.s32.totalorder 1, %s11
    %p156 = scmp.lt.s32.totalorder %s11, 3
    %p157 = pnand %p155, %p156
    %p158 = pneg %p157
    // Predicated region
    $region9: #{simple_block_forward.3} parent=5 // pred_check
      _
    $region10: #{simple_block_forward.3} parent=5 // pred_check_branch
      %160 = sbr.rel (%p157) target = $region12
    $region11: #{simple_block_forward.3} parent=5 // pred_region
      %s161 = ssub.s32 %s11, 1
      // Predicated region
      $region13: #{simple_block_forward.3} parent=11 // pred_check
        %p162 = pneg %p58
      $region14: #{simple_block_forward.3} parent=11 // pred_check_branch
        %164 = sbr.rel (%p162) target = $region16
      $region15: #{simple_block_forward.3} parent=11 // pred_region
        _
      $region16: #{simple_block_forward.3} parent=11 // pred_fallthru
        _
      // Predicated region
      $region17: #{simple_block_forward.3} parent=11 // pred_check
        %p165 = pneg %p79
      $region18: #{simple_block_forward.3} parent=11 // pred_check_branch
        %167 = sbr.rel (%p165) target = $region20
      $region19: #{simple_block_forward.3} parent=11 // pred_region
        _
      $region20: #{simple_block_forward.3} parent=11 // pred_fallthru
        _
      // Predicated region
      $region21: #{simple_block_forward.3} parent=11 // pred_check
        %p168 = pneg %p100
      $region22: #{simple_block_forward.3} parent=11 // pred_check_branch
        %170 = sbr.rel (%p168) target = $region24
      $region23: #{simple_block_forward.3} parent=11 // pred_region
        _
      $region24: #{simple_block_forward.3} parent=11 // pred_fallthru
        _
      // Predicated region
      $region25: #{simple_block_forward.3} parent=11 // pred_check
        %p171 = pneg %p121
      $region26: #{simple_block_forward.3} parent=11 // pred_check_branch
        %173 = sbr.rel (%p171) target = $region28
      $region27: #{simple_block_forward.3} parent=11 // pred_region
        _
      $region28: #{simple_block_forward.3} parent=11 // pred_fallthru
        _
    $region12: #{simple_block_forward.3} parent=5 // pred_fallthru
      _
    %p174 = scmp.lt.s32.totalorder %s11, 2
    // Predicated region
    $region29: #{simple_block_forward.3} parent=5 // pred_check
      %p175 = pneg %p174
    $region30: #{simple_block_forward.3} parent=5 // pred_check_branch
      %177 = sbr.rel (%p175) target = $region32
    $region31: #{simple_block_forward.3} parent=5 // pred_region
      // Predicated region
      $region33: #{simple_block_forward.3} parent=31 // pred_check
        %p178 = pneg %p31
      $region34: #{simple_block_forward.3} parent=31 // pred_check_branch
        %180 = sbr.rel (%p178) target = $region36
      $region35: #{simple_block_forward.3} parent=31 // pred_region
        %p181 = scmp.lt.s32.totalorder %s11, 1
        %s182 = scalar_select %p181, %s11, 1
        %s183 = smul.addr %s182, 3
        %s184 = smul.addr %s183, 4
        %s185 = scalar_lea.vmem %s0, %s184
      $region36: #{simple_block_forward.3} parent=31 // pred_fallthru
        _
    $region32: #{simple_block_forward.3} parent=5 // pred_fallthru
      _
    %p186 = scmp.le.s32.totalorder 1, %s11
    %p187 = scmp.lt.s32.totalorder %s11, 3
    %p188 = pnand %p186, %p187
    %p189 = pneg %p188
    // Predicated region
    $region37: #{simple_block_forward.3} parent=5 // pred_check
      _
    $region38: #{simple_block_forward.3} parent=5 // pred_check_branch
      %191 = sbr.rel (%p188) target = $region40
    $region39: #{simple_block_forward.3} parent=5 // pred_region
      %s192 = ssub.s32 %s11, 1
      %p193 = scmp.lt.s32.totalorder %s16, 1
      %s194 = scalar_select %p193, %s16, 1
      %s195 = smul.addr %s194, 3
      %s196 = smul.addr %s195, 4
      %s197 = scalar_lea.vmem %s0, %s196
      %p198 = pneg %p37
      %p199 = pneg %p34
      %p200 = pneg %p58
      %p201 = pneg %p55
      %p202 = pneg %p79
      %p203 = pneg %p76
      %p204 = pneg %p100
      %p205 = pneg %p97
      %p206 = pneg %p121
      %p207 = pneg %p118
      %p208 = pneg %p147
      %p209 = pneg %p144
      %p210 = scmp.lt.s32.totalorder %s16, 1
      %s211 = scalar_select %p210, %s16, 1
      %s212 = smul.addr %s211, 4
      %s213 = smul.addr %s212, 8
      %s214 = scalar_lea.vmem %s5, %s213
      %p215 = scmp.lt.s32.totalorder %s16, 1
      %s216 = scalar_select %p215, %s16, 1
      %s217 = smul.addr %s216, 3
      %s218 = smul.addr %s217, 4
      %s219 = scalar_lea.vmem %s0, %s218
      %p220 = scmp.lt.s32.totalorder %s16, 1
      %s221 = scalar_select %p220, %s16, 1
      %s222 = smul.addr %s221, 4
      %s223 = smul.addr %s222, 8
      %s224 = scalar_lea.vmem %s5, %s223
      %v225 = vld [vmem:[%s219] sm:$0xff]
      %v226 = vld [vmem:[%s2] sm:$0x3]
      %v228 = vperm.slane %v226, 0
      %v229 = vperm.slane %v226, 1
      %v230 = vrot.slane %v229, 4
      %vm231 = vcmask 1043456
      %v232 = vsel %vm231, %v228, %v230
      %v234 = vmul.f32 %v225, %v232
      %v235 = vld [vmem:[%s1] sm:$0xff]
      %v236 = vld [vmem:[%s1 + $0x8] sm:$0xff]
      %v237 = vld [vmem:[%s219 + $0x8] sm:$0xf]
      %s238 = scalar_lea.vmem %s2, 2
      %v239 = vld [vmem:[%s238] sm:$0x3]
      %v241 = vperm.slane %v239, 0
      %v242 = vperm.slane %v239, 1
      %v243 = vrot.slane %v242, 4
      %v244 = vsel %vm231, %v241, %v243
      %245 = vrot.lane.b32.xlu0 %v244, 1
      %v246 = vpop.permute.xlu0 %245
      %v247 = vrot.slane %v246, 4
      %vm248 = vcmask 7168
      %v249 = vsel %vm248, %v247, %v246
      %v252 = vmul.f32 %v225, %v249
      %v253 = vmul.f32 %v237, %v247
      %s254 = scalar_lea.vmem %s1, 16
      %v255 = vld [vmem:[%s254] sm:$0xff]
      %v256 = vld [vmem:[%s254 + $0x8] sm:$0xff]
      %259 = vst [vmem:[#allocation1] ss:$2 sm:$0xff] %v252
      %s260 = scalar_lea.vmem [#allocation1], 16
      %261 = vst [vmem:[%s260] ss:$2 sm:$0xff] %v253
      %v262 = vld.sshfl [vmem:[#allocation1] sm:$0xff pattern:$0x75316420]
      %v263 = vld.sshfl [vmem:[#allocation1 + $0x8] sm:$0xff pattern:$0x75316420]
      %v264 = vld.sshfl [vmem:[#allocation1 + $0x10] sm:$0xff pattern:$0x75316420]
      %265 = vrot.lane.b32.xlu0 %v262, 127
      %v266 = vpop.permute.xlu0 %265
      %267 = vrot.lane.b32.xlu0 %v263, 127
      %v268 = vpop.permute.xlu0 %267
      %269 = vrot.lane.b32.xlu0 %v264, 127
      %v270 = vpop.permute.xlu0 %269
      %vm271 = vcmask 1039360
      %v272 = vsel %vm271, %v266, %v268
      %v273 = vsel %vm271, %v268, %v270
      %vm274 = vcmask 31744
      %v276 = vsel %vm274, %v255, 0
      %v279 = vsel %vm274, %v256, 0
      %v281 = vsel %vm231, %v272, 0
      %v283 = vsel %vm231, %v273, 0
      %285 = vmatpush.msra.mxu0 0.0
      %286 = vmatpush.msra.mxu0 0.0
      %287 = vmatpush.msra.mxu0 0.0
      %288 = vmatpush.msra.mxu0 0.0
      %289 = vmatpush.msra.mxu0 0.0
      %290 = vmatpush.msra.mxu0 0.0
      %291 = vmatpush.msra.mxu0 0.0
      %292 = vmatpush.msra.mxu0 0.0
      %293 = vmatpush.msra.mxu0 0.0
      %294 = vmatpush.msra.mxu0 0.0
      %295 = vmatpush.msra.mxu0 0.0
      %296 = vmatpush.msra.mxu0 0.0
      %297 = vmatpush.msra.mxu0 0.0
      %298 = vmatpush.msra.mxu0 0.0
      %299 = vmatpush.msra.mxu0 0.0
      %300 = vmatpush.msra.mxu0 %v281
      %301 = vmatmul.f32.gmra.mxu0 %v276
      %v302 = vpop.f32.mrf.mxu0
      %v303 = vadd.f32 0.0, %v302
      %304 = vmatmul.f32.gmra.mxu0 %v279
      %v305 = vpop.f32.mrf.mxu0
      %v306 = vadd.f32 0.0, %v305
      %307 = vdwg.mxu0
      %308 = vmatpush.msra.mxu0 0.0
      %309 = vmatpush.msra.mxu0 0.0
      %310 = vmatpush.msra.mxu0 0.0
      %311 = vmatpush.msra.mxu0 0.0
      %312 = vmatpush.msra.mxu0 0.0
      %313 = vmatpush.msra.mxu0 0.0
      %314 = vmatpush.msra.mxu0 0.0
      %315 = vmatpush.msra.mxu0 0.0
      %316 = vmatpush.msra.mxu0 0.0
      %317 = vmatpush.msra.mxu0 0.0
      %318 = vmatpush.msra.mxu0 0.0
      %319 = vmatpush.msra.mxu0 0.0
      %320 = vmatpush.msra.mxu0 0.0
      %321 = vmatpush.msra.mxu0 0.0
      %322 = vmatpush.msra.mxu0 0.0
      %323 = vmatpush.msra.mxu0 %v283
      %324 = vmatmul.f32.gmra.mxu0 %v276
      %v325 = vpop.f32.mrf.mxu0
      %v326 = vadd.f32 0.0, %v325
      %327 = vmatmul.f32.gmra.mxu0 %v279
      %v328 = vpop.f32.mrf.mxu0
      %v329 = vadd.f32 0.0, %v328
      %330 = vdwg.mxu0
      %332 = vst [vmem:[#allocation1] ss:$2 sm:$0xff] %v234
      %v333 = vld.sshfl [vmem:[#allocation1] sm:$0xff pattern:$0x75316420]
      %v334 = vld.sshfl [vmem:[#allocation1 + $0x8] sm:$0xff pattern:$0x75316420]
      %v336 = vsel %vm274, %v235, 0
      %v339 = vsel %vm274, %v236, 0
      %v341 = vsel %vm231, %v333, 0
      %v343 = vsel %vm231, %v334, 0
      %345 = vmatpush.msra.mxu0 0.0
      %346 = vmatpush.msra.mxu0 0.0
      %347 = vmatpush.msra.mxu0 0.0
      %348 = vmatpush.msra.mxu0 0.0
      %349 = vmatpush.msra.mxu0 0.0
      %350 = vmatpush.msra.mxu0 0.0
      %351 = vmatpush.msra.mxu0 0.0
      %352 = vmatpush.msra.mxu0 0.0
      %353 = vmatpush.msra.mxu0 0.0
      %354 = vmatpush.msra.mxu0 0.0
      %355 = vmatpush.msra.mxu0 0.0
      %356 = vmatpush.msra.mxu0 0.0
      %357 = vmatpush.msra.mxu0 0.0
      %358 = vmatpush.msra.mxu0 0.0
      %359 = vmatpush.msra.mxu0 0.0
      %360 = vmatpush.msra.mxu0 %v341
      %361 = vmatmul.f32.gmra.mxu0 %v336
      %v362 = vpop.f32.mrf.mxu0
      %v363 = vadd.f32 %v303, %v362
      %364 = vmatmul.f32.gmra.mxu0 %v339
      %v365 = vpop.f32.mrf.mxu0
      %v366 = vadd.f32 %v306, %v365
      %367 = vdwg.mxu0
      %368 = vmatpush.msra.mxu0 0.0
      %369 = vmatpush.msra.mxu0 0.0
      %370 = vmatpush.msra.mxu0 0.0
      %371 = vmatpush.msra.mxu0 0.0
      %372 = vmatpush.msra.mxu0 0.0
      %373 = vmatpush.msra.mxu0 0.0
      %374 = vmatpush.msra.mxu0 0.0
      %375 = vmatpush.msra.mxu0 0.0
      %376 = vmatpush.msra.mxu0 0.0
      %377 = vmatpush.msra.mxu0 0.0
      %378 = vmatpush.msra.mxu0 0.0
      %379 = vmatpush.msra.mxu0 0.0
      %380 = vmatpush.msra.mxu0 0.0
      %381 = vmatpush.msra.mxu0 0.0
      %382 = vmatpush.msra.mxu0 0.0
      %383 = vmatpush.msra.mxu0 %v343
      %384 = vmatmul.f32.gmra.mxu0 %v336
      %v385 = vpop.f32.mrf.mxu0
      %v386 = vadd.f32 %v326, %v385
      %387 = vmatmul.f32.gmra.mxu0 %v339
      %v388 = vpop.f32.mrf.mxu0
      %v389 = vadd.f32 %v329, %v388
      %390 = vdwg.mxu0
      %v391 = vld [vmem:[%s219] sm:$0xff]
      %v392 = vld [vmem:[%s219 + $0x8] sm:$0xf]
      %s393 = scalar_lea.vmem %s2, 4
      %v394 = vld [vmem:[%s393] sm:$0x3]
      %v396 = vperm.slane %v394, 0
      %v397 = vperm.slane %v394, 1
      %v398 = vrot.slane %v397, 4
      %v399 = vsel %vm231, %v396, %v398
      %400 = vrot.lane.b32.xlu0 %v399, 2
      %v401 = vpop.permute.xlu0 %400
      %v402 = vrot.slane %v401, 4
      %vm403 = vcmask 15360
      %v404 = vsel %vm403, %v402, %v401
      %v407 = vmul.f32 %v391, %v404
      %v408 = vmul.f32 %v392, %v402
      %s409 = scalar_lea.vmem %s1, 32
      %v410 = vld [vmem:[%s409] sm:$0xff]
      %v411 = vld [vmem:[%s409 + $0x8] sm:$0xff]
      %414 = vst [vmem:[#allocation1] ss:$2 sm:$0xff] %v407
      %s415 = scalar_lea.vmem [#allocation1], 16
      %416 = vst [vmem:[%s415] ss:$2 sm:$0xff] %v408
      %v417 = vld.sshfl [vmem:[#allocation1] sm:$0xff pattern:$0x75316420]
      %v418 = vld.sshfl [vmem:[#allocation1 + $0x8] sm:$0xff pattern:$0x75316420]
      %v419 = vld.sshfl [vmem:[#allocation1 + $0x10] sm:$0xff pattern:$0x75316420]
      %420 = vrot.lane.b32.xlu0 %v417, 126
      %v421 = vpop.permute.xlu0 %420
      %422 = vrot.lane.b32.xlu0 %v418, 126
      %v423 = vpop.permute.xlu0 %422
      %424 = vrot.lane.b32.xlu0 %v419, 126
      %v425 = vpop.permute.xlu0 %424
      %vm426 = vcmask 1031168
      %v427 = vsel %vm426, %v421, %v423
      %v428 = vsel %vm426, %v423, %v425
      %v430 = vsel %vm274, %v410, 0
      %v433 = vsel %vm274, %v411, 0
      %v435 = vsel %vm231, %v427, 0
      %v437 = vsel %vm231, %v428, 0
      %439 = vmatpush.msra.mxu0 0.0
      %440 = vmatpush.msra.mxu0 0.0
      %441 = vmatpush.msra.mxu0 0.0
      %442 = vmatpush.msra.mxu0 0.0
      %443 = vmatpush.msra.mxu0 0.0
      %444 = vmatpush.msra.mxu0 0.0
      %445 = vmatpush.msra.mxu0 0.0
      %446 = vmatpush.msra.mxu0 0.0
      %447 = vmatpush.msra.mxu0 0.0
      %448 = vmatpush.msra.mxu0 0.0
      %449 = vmatpush.msra.mxu0 0.0
      %450 = vmatpush.msra.mxu0 0.0
      %451 = vmatpush.msra.mxu0 0.0
      %452 = vmatpush.msra.mxu0 0.0
      %453 = vmatpush.msra.mxu0 0.0
      %454 = vmatpush.msra.mxu0 %v435
      %455 = vmatmul.f32.gmra.mxu0 %v430
      %v456 = vpop.f32.mrf.mxu0
      %v457 = vadd.f32 0.0, %v456
      %458 = vmatmul.f32.gmra.mxu0 %v433
      %v459 = vpop.f32.mrf.mxu0
      %v460 = vadd.f32 0.0, %v459
      %461 = vdwg.mxu0
      %462 = vmatpush.msra.mxu0 0.0
      %463 = vmatpush.msra.mxu0 0.0
      %464 = vmatpush.msra.mxu0 0.0
      %465 = vmatpush.msra.mxu0 0.0
      %466 = vmatpush.msra.mxu0 0.0
      %467 = vmatpush.msra.mxu0 0.0
      %468 = vmatpush.msra.mxu0 0.0
      %469 = vmatpush.msra.mxu0 0.0
      %470 = vmatpush.msra.mxu0 0.0
      %471 = vmatpush.msra.mxu0 0.0
      %472 = vmatpush.msra.mxu0 0.0
      %473 = vmatpush.msra.mxu0 0.0
      %474 = vmatpush.msra.mxu0 0.0
      %475 = vmatpush.msra.mxu0 0.0
      %476 = vmatpush.msra.mxu0 0.0
      %477 = vmatpush.msra.mxu0 %v437
      %478 = vmatmul.f32.gmra.mxu0 %v430
      %v479 = vpop.f32.mrf.mxu0
      %v480 = vadd.f32 0.0, %v479
      %481 = vmatmul.f32.gmra.mxu0 %v433
      %v482 = vpop.f32.mrf.mxu0
      %v483 = vadd.f32 0.0, %v482
      %484 = vdwg.mxu0
      %v485 = vadd.f32 %v363, %v457
      %v486 = vadd.f32 %v386, %v480
      %v487 = vadd.f32 %v366, %v460
      %v488 = vadd.f32 %v389, %v483
      %v489 = vld [vmem:[%s219] sm:$0xff]
      %v490 = vld [vmem:[%s219 + $0x8] sm:$0xf]
      %s491 = scalar_lea.vmem %s2, 6
      %v492 = vld [vmem:[%s491] sm:$0x3]
      %v494 = vperm.slane %v492, 0
      %v495 = vperm.slane %v492, 1
      %v496 = vrot.slane %v495, 4
      %v497 = vsel %vm231, %v494, %v496
      %498 = vrot.lane.b32.xlu0 %v497, 16
      %v499 = vpop.permute.xlu0 %498
      %v500 = vrot.slane %v499, 4
      %vm501 = vcmask 130048
      %v502 = vsel %vm501, %v500, %v499
      %v505 = vmul.f32 %v489, %v502
      %v506 = vmul.f32 %v490, %v500
      %s507 = scalar_lea.vmem %s1, 48
      %v508 = vld [vmem:[%s507] sm:$0xff]
      %v509 = vld [vmem:[%s507 + $0x8] sm:$0xff]
      %512 = vst [vmem:[#allocation1] ss:$2 sm:$0xff] %v505
      %s513 = scalar_lea.vmem [#allocation1], 16
      %514 = vst [vmem:[%s513] ss:$2 sm:$0xff] %v506
      %v515 = vld.sshfl [vmem:[#allocation1] sm:$0xff pattern:$0x75316420]
      %v516 = vld.sshfl [vmem:[#allocation1 + $0x8] sm:$0xff pattern:$0x75316420]
      %v517 = vld.sshfl [vmem:[#allocation1 + $0x10] sm:$0xff pattern:$0x75316420]
      %518 = vrot.lane.b32.xlu0 %v515, 112
      %v519 = vpop.permute.xlu0 %518
      %520 = vrot.lane.b32.xlu0 %v516, 112
      %v521 = vpop.permute.xlu0 %520
      %522 = vrot.lane.b32.xlu0 %v517, 112
      %v523 = vpop.permute.xlu0 %522
      %vm524 = vcmask 916480
      %v525 = vsel %vm524, %v519, %v521
      %v526 = vsel %vm524, %v521, %v523
      %v528 = vsel %vm274, %v508, 0
      %v531 = vsel %vm274, %v509, 0
      %v533 = vsel %vm231, %v525, 0
      %v535 = vsel %vm231, %v526, 0
      %537 = vmatpush.msra.mxu0 0.0
      %538 = vmatpush.msra.mxu0 0.0
      %539 = vmatpush.msra.mxu0 0.0
      %540 = vmatpush.msra.mxu0 0.0
      %541 = vmatpush.msra.mxu0 0.0
      %542 = vmatpush.msra.mxu0 0.0
      %543 = vmatpush.msra.mxu0 0.0
      %544 = vmatpush.msra.mxu0 0.0
      %545 = vmatpush.msra.mxu0 0.0
      %546 = vmatpush.msra.mxu0 0.0
      %547 = vmatpush.msra.mxu0 0.0
      %548 = vmatpush.msra.mxu0 0.0
      %549 = vmatpush.msra.mxu0 0.0
      %550 = vmatpush.msra.mxu0 0.0
      %551 = vmatpush.msra.mxu0 0.0
      %552 = vmatpush.msra.mxu0 %v533
      %553 = vmatmul.f32.gmra.mxu0 %v528
      %v554 = vpop.f32.mrf.mxu0
      %v555 = vadd.f32 0.0, %v554
      %556 = vmatmul.f32.gmra.mxu0 %v531
      %v557 = vpop.f32.mrf.mxu0
      %v558 = vadd.f32 0.0, %v557
      %559 = vdwg.mxu0
      %560 = vmatpush.msra.mxu0 0.0
      %561 = vmatpush.msra.mxu0 0.0
      %562 = vmatpush.msra.mxu0 0.0
      %563 = vmatpush.msra.mxu0 0.0
      %564 = vmatpush.msra.mxu0 0.0
      %565 = vmatpush.msra.mxu0 0.0
      %566 = vmatpush.msra.mxu0 0.0
      %567 = vmatpush.msra.mxu0 0.0
      %568 = vmatpush.msra.mxu0 0.0
      %569 = vmatpush.msra.mxu0 0.0
      %570 = vmatpush.msra.mxu0 0.0
      %571 = vmatpush.msra.mxu0 0.0
      %572 = vmatpush.msra.mxu0 0.0
      %573 = vmatpush.msra.mxu0 0.0
      %574 = vmatpush.msra.mxu0 0.0
      %575 = vmatpush.msra.mxu0 %v535
      %576 = vmatmul.f32.gmra.mxu0 %v528
      %v577 = vpop.f32.mrf.mxu0
      %v578 = vadd.f32 0.0, %v577
      %579 = vmatmul.f32.gmra.mxu0 %v531
      %v580 = vpop.f32.mrf.mxu0
      %v581 = vadd.f32 0.0, %v580
      %582 = vdwg.mxu0
      %v583 = vadd.f32 %v485, %v555
      %v584 = vadd.f32 %v486, %v578
      %v585 = vadd.f32 %v487, %v558
      %v586 = vadd.f32 %v488, %v581
      %v587 = vld [vmem:[%s219] sm:$0xff]
      %v588 = vld [vmem:[%s219 + $0x8] sm:$0xf]
      %s589 = scalar_lea.vmem %s1, 64
      %v590 = vld [vmem:[%s589] sm:$0xff]
      %v591 = vld [vmem:[%s589 + $0x8] sm:$0xff]
      %594 = vst [vmem:[#allocation1] ss:$2 sm:$0xff] %v587
      %s595 = scalar_lea.vmem [#allocation1], 16
      %596 = vst [vmem:[%s595] ss:$2 sm:$0xff] %v588
      %v597 = vld.sshfl [vmem:[#allocation1] sm:$0xff pattern:$0x75316420]
      %v598 = vld.sshfl [vmem:[#allocation1 + $0x8] sm:$0xff pattern:$0x75316420]
      %v599 = vld.sshfl [vmem:[#allocation1 + $0x10] sm:$0xff pattern:$0x75316420]
      %600 = vrot.lane.b32.xlu0 %v597, 111
      %v601 = vpop.permute.xlu0 %600
      %602 = vrot.lane.b32.xlu0 %v598, 111
      %v603 = vpop.permute.xlu0 %602
      %604 = vrot.lane.b32.xlu0 %v599, 111
      %v605 = vpop.permute.xlu0 %604
      %vm606 = vcmask 908288
      %v607 = vsel %vm606, %v601, %v603
      %v608 = vsel %vm606, %v603, %v605
      %v610 = vsel %vm274, %v590, 0
      %v613 = vsel %vm274, %v591, 0
      %v615 = vsel %vm231, %v607, 0
      %v617 = vsel %vm231, %v608, 0
      %619 = vmatpush.msra.mxu0 0.0
      %620 = vmatpush.msra.mxu0 0.0
      %621 = vmatpush.msra.mxu0 0.0
      %622 = vmatpush.msra.mxu0 0.0
      %623 = vmatpush.msra.mxu0 0.0
      %624 = vmatpush.msra.mxu0 0.0
      %625 = vmatpush.msra.mxu0 0.0
      %626 = vmatpush.msra.mxu0 0.0
      %627 = vmatpush.msra.mxu0 0.0
      %628 = vmatpush.msra.mxu0 0.0
      %629 = vmatpush.msra.mxu0 0.0
      %630 = vmatpush.msra.mxu0 0.0
      %631 = vmatpush.msra.mxu0 0.0
      %632 = vmatpush.msra.mxu0 0.0
      %633 = vmatpush.msra.mxu0 0.0
      %634 = vmatpush.msra.mxu0 %v615
      %635 = vmatmul.f32.gmra.mxu0 %v610
      %v636 = vpop.f32.mrf.mxu0
      %v637 = vadd.f32 0.0, %v636
      %638 = vmatmul.f32.gmra.mxu0 %v613
      %v639 = vpop.f32.mrf.mxu0
      %v640 = vadd.f32 0.0, %v639
      %641 = vdwg.mxu0
      %642 = vmatpush.msra.mxu0 0.0
      %643 = vmatpush.msra.mxu0 0.0
      %644 = vmatpush.msra.mxu0 0.0
      %645 = vmatpush.msra.mxu0 0.0
      %646 = vmatpush.msra.mxu0 0.0
      %647 = vmatpush.msra.mxu0 0.0
      %648 = vmatpush.msra.mxu0 0.0
      %649 = vmatpush.msra.mxu0 0.0
      %650 = vmatpush.msra.mxu0 0.0
      %651 = vmatpush.msra.mxu0 0.0
      %652 = vmatpush.msra.mxu0 0.0
      %653 = vmatpush.msra.mxu0 0.0
      %654 = vmatpush.msra.mxu0 0.0
      %655 = vmatpush.msra.mxu0 0.0
      %656 = vmatpush.msra.mxu0 0.0
      %657 = vmatpush.msra.mxu0 %v617
      %658 = vmatmul.f32.gmra.mxu0 %v610
      %v659 = vpop.f32.mrf.mxu0
      %v660 = vadd.f32 0.0, %v659
      %661 = vmatmul.f32.gmra.mxu0 %v613
      %v662 = vpop.f32.mrf.mxu0
      %v663 = vadd.f32 0.0, %v662
      %664 = vdwg.mxu0
      %v665 = vadd.f32 %v583, %v637
      %v666 = vadd.f32 %v584, %v660
      %v667 = vadd.f32 %v585, %v640
      %v668 = vadd.f32 %v586, %v663
      %v669 = vld [vmem:[%s219] sm:$0xff]
      %v670 = vld [vmem:[%s219 + $0x8] sm:$0xf]
      %s671 = scalar_lea.vmem %s2, 10
      %v672 = vld [vmem:[%s671] sm:$0x3]
      %v674 = vperm.slane %v672, 0
      %v675 = vperm.slane %v672, 1
      %v676 = vrot.slane %v675, 4
      %v677 = vsel %vm231, %v674, %v676
      %678 = vrot.lane.b32.xlu0 %v677, 18
      %v679 = vpop.permute.xlu0 %678
      %v680 = vrot.slane %v679, 4
      %vm681 = vcmask 146432
      %v682 = vsel %vm681, %v680, %v679
      %v685 = vmul.f32 %v669, %v682
      %v686 = vmul.f32 %v670, %v680
      %s687 = scalar_lea.vmem %s1, 80
      %v688 = vld [vmem:[%s687] sm:$0xff]
      %v689 = vld [vmem:[%s687 + $0x8] sm:$0xff]
      %692 = vst [vmem:[#allocation1] ss:$2 sm:$0xff] %v685
      %s693 = scalar_lea.vmem [#allocation1], 16
      %694 = vst [vmem:[%s693] ss:$2 sm:$0xff] %v686
      %v695 = vld.sshfl [vmem:[#allocation1] sm:$0xff pattern:$0x75316420]
      %v696 = vld.sshfl [vmem:[#allocation1 + $0x8] sm:$0xff pattern:$0x75316420]
      %v697 = vld.sshfl [vmem:[#allocation1 + $0x10] sm:$0xff pattern:$0x75316420]
      %698 = vrot.lane.b32.xlu0 %v695, 110
      %v699 = vpop.permute.xlu0 %698
      %700 = vrot.lane.b32.xlu0 %v696, 110
      %v701 = vpop.permute.xlu0 %700
      %702 = vrot.lane.b32.xlu0 %v697, 110
      %v703 = vpop.permute.xlu0 %702
      %vm704 = vcmask 900096
      %v705 = vsel %vm704, %v699, %v701
      %v706 = vsel %vm704, %v701, %v703
      %v708 = vsel %vm274, %v688, 0
      %v711 = vsel %vm274, %v689, 0
      %v713 = vsel %vm231, %v705, 0
      %v715 = vsel %vm231, %v706, 0
      %717 = vmatpush.msra.mxu0 0.0
      %718 = vmatpush.msra.mxu0 0.0
      %719 = vmatpush.msra.mxu0 0.0
      %720 = vmatpush.msra.mxu0 0.0
      %721 = vmatpush.msra.mxu0 0.0
      %722 = vmatpush.msra.mxu0 0.0
      %723 = vmatpush.msra.mxu0 0.0
      %724 = vmatpush.msra.mxu0 0.0
      %725 = vmatpush.msra.mxu0 0.0
      %726 = vmatpush.msra.mxu0 0.0
      %727 = vmatpush.msra.mxu0 0.0
      %728 = vmatpush.msra.mxu0 0.0
      %729 = vmatpush.msra.mxu0 0.0
      %730 = vmatpush.msra.mxu0 0.0
      %731 = vmatpush.msra.mxu0 0.0
      %732 = vmatpush.msra.mxu0 %v713
      %733 = vmatmul.f32.gmra.mxu0 %v708
      %v734 = vpop.f32.mrf.mxu0
      %v735 = vadd.f32 0.0, %v734
      %736 = vmatmul.f32.gmra.mxu0 %v711
      %v737 = vpop.f32.mrf.mxu0
      %v738 = vadd.f32 0.0, %v737
      %739 = vdwg.mxu0
      %740 = vmatpush.msra.mxu0 0.0
      %741 = vmatpush.msra.mxu0 0.0
      %742 = vmatpush.msra.mxu0 0.0
      %743 = vmatpush.msra.mxu0 0.0
      %744 = vmatpush.msra.mxu0 0.0
      %745 = vmatpush.msra.mxu0 0.0
      %746 = vmatpush.msra.mxu0 0.0
      %747 = vmatpush.msra.mxu0 0.0
      %748 = vmatpush.msra.mxu0 0.0
      %749 = vmatpush.msra.mxu0 0.0
      %750 = vmatpush.msra.mxu0 0.0
      %751 = vmatpush.msra.mxu0 0.0
      %752 = vmatpush.msra.mxu0 0.0
      %753 = vmatpush.msra.mxu0 0.0
      %754 = vmatpush.msra.mxu0 0.0
      %755 = vmatpush.msra.mxu0 %v715
      %756 = vmatmul.f32.gmra.mxu0 %v708
      %v757 = vpop.f32.mrf.mxu0
      %v758 = vadd.f32 0.0, %v757
      %759 = vmatmul.f32.gmra.mxu0 %v711
      %v760 = vpop.f32.mrf.mxu0
      %v761 = vadd.f32 0.0, %v760
      %762 = vdwg.mxu0
      %v763 = vadd.f32 %v665, %v735
      %v764 = vadd.f32 %v666, %v758
      %v765 = vadd.f32 %v667, %v738
      %v766 = vadd.f32 %v668, %v761
      %v767 = vld [vmem:[%s219] sm:$0xff]
      %v768 = vld [vmem:[%s219 + $0x8] sm:$0xf]
      %s769 = scalar_lea.vmem %s2, 12
      %v770 = vld [vmem:[%s769] sm:$0x3]
      %v772 = vperm.slane %v770, 0
      %v773 = vperm.slane %v770, 1
      %v774 = vrot.slane %v773, 4
      %v775 = vsel %vm231, %v772, %v774
      %776 = vrot.lane.b32.xlu0 %v775, 32
      %v777 = vpop.permute.xlu0 %776
      %v778 = vrot.slane %v777, 4
      %vm779 = vcmask 261120
      %v780 = vsel %vm779, %v778, %v777
      %v783 = vmul.f32 %v767, %v780
      %v784 = vmul.f32 %v768, %v778
      %s785 = scalar_lea.vmem %s1, 96
      %v786 = vld [vmem:[%s785] sm:$0xff]
      %v787 = vld [vmem:[%s785 + $0x8] sm:$0xff]
      %790 = vst [vmem:[#allocation1] ss:$2 sm:$0xff] %v783
      %s791 = scalar_lea.vmem [#allocation1], 16
      %792 = vst [vmem:[%s791] ss:$2 sm:$0xff] %v784
      %v793 = vld.sshfl [vmem:[#allocation1] sm:$0xff pattern:$0x75316420]
      %v794 = vld.sshfl [vmem:[#allocation1 + $0x8] sm:$0xff pattern:$0x75316420]
      %v795 = vld.sshfl [vmem:[#allocation1 + $0x10] sm:$0xff pattern:$0x75316420]
      %796 = vrot.lane.b32.xlu0 %v793, 96
      %v797 = vpop.permute.xlu0 %796
      %798 = vrot.lane.b32.xlu0 %v794, 96
      %v799 = vpop.permute.xlu0 %798
      %800 = vrot.lane.b32.xlu0 %v795, 96
      %v801 = vpop.permute.xlu0 %800
      %vm802 = vcmask 785408
      %v803 = vsel %vm802, %v797, %v799
      %v804 = vsel %vm802, %v799, %v801
      %v806 = vsel %vm274, %v786, 0
      %v809 = vsel %vm274, %v787, 0
      %v811 = vsel %vm231, %v803, 0
      %v813 = vsel %vm231, %v804, 0
      %815 = vmatpush.msra.mxu0 0.0
      %816 = vmatpush.msra.mxu0 0.0
      %817 = vmatpush.msra.mxu0 0.0
      %818 = vmatpush.msra.mxu0 0.0
      %819 = vmatpush.msra.mxu0 0.0
      %820 = vmatpush.msra.mxu0 0.0
      %821 = vmatpush.msra.mxu0 0.0
      %822 = vmatpush.msra.mxu0 0.0
      %823 = vmatpush.msra.mxu0 0.0
      %824 = vmatpush.msra.mxu0 0.0
      %825 = vmatpush.msra.mxu0 0.0
      %826 = vmatpush.msra.mxu0 0.0
      %827 = vmatpush.msra.mxu0 0.0
      %828 = vmatpush.msra.mxu0 0.0
      %829 = vmatpush.msra.mxu0 0.0
      %830 = vmatpush.msra.mxu0 %v811
      %831 = vmatmul.f32.gmra.mxu0 %v806
      %v832 = vpop.f32.mrf.mxu0
      %v833 = vadd.f32 0.0, %v832
      %834 = vmatmul.f32.gmra.mxu0 %v809
      %v835 = vpop.f32.mrf.mxu0
      %v836 = vadd.f32 0.0, %v835
      %837 = vdwg.mxu0
      %838 = vmatpush.msra.mxu0 0.0
      %839 = vmatpush.msra.mxu0 0.0
      %840 = vmatpush.msra.mxu0 0.0
      %841 = vmatpush.msra.mxu0 0.0
      %842 = vmatpush.msra.mxu0 0.0
      %843 = vmatpush.msra.mxu0 0.0
      %844 = vmatpush.msra.mxu0 0.0
      %845 = vmatpush.msra.mxu0 0.0
      %846 = vmatpush.msra.mxu0 0.0
      %847 = vmatpush.msra.mxu0 0.0
      %848 = vmatpush.msra.mxu0 0.0
      %849 = vmatpush.msra.mxu0 0.0
      %850 = vmatpush.msra.mxu0 0.0
      %851 = vmatpush.msra.mxu0 0.0
      %852 = vmatpush.msra.mxu0 0.0
      %853 = vmatpush.msra.mxu0 %v813
      %854 = vmatmul.f32.gmra.mxu0 %v806
      %v855 = vpop.f32.mrf.mxu0
      %v856 = vadd.f32 0.0, %v855
      %857 = vmatmul.f32.gmra.mxu0 %v809
      %v858 = vpop.f32.mrf.mxu0
      %v859 = vadd.f32 0.0, %v858
      %860 = vdwg.mxu0
      %v861 = vadd.f32 %v763, %v833
      %v862 = vadd.f32 %v764, %v856
      %v863 = vadd.f32 %v765, %v836
      %v864 = vadd.f32 %v766, %v859
      %v865 = vld [vmem:[%s219] sm:$0xff]
      %v866 = vld [vmem:[%s219 + $0x8] sm:$0xf]
      %s867 = scalar_lea.vmem %s2, 14
      %v868 = vld [vmem:[%s867] sm:$0x3]
      %v870 = vperm.slane %v868, 0
      %v871 = vperm.slane %v868, 1
      %v872 = vrot.slane %v871, 4
      %v873 = vsel %vm231, %v870, %v872
      %874 = vrot.lane.b32.xlu0 %v873, 33
      %v875 = vpop.permute.xlu0 %874
      %v876 = vrot.slane %v875, 4
      %vm877 = vcmask 269312
      %v878 = vsel %vm877, %v876, %v875
      %v881 = vmul.f32 %v865, %v878
      %v882 = vmul.f32 %v866, %v876
      %s883 = scalar_lea.vmem %s1, 112
      %v884 = vld [vmem:[%s883] sm:$0xff]
      %v885 = vld [vmem:[%s883 + $0x8] sm:$0xff]
      %888 = vst [vmem:[#allocation1] ss:$2 sm:$0xff] %v881
      %s889 = scalar_lea.vmem [#allocation1], 16
      %890 = vst [vmem:[%s889] ss:$2 sm:$0xff] %v882
      %v891 = vld.sshfl [vmem:[#allocation1] sm:$0xff pattern:$0x75316420]
      %v892 = vld.sshfl [vmem:[#allocation1 + $0x8] sm:$0xff pattern:$0x75316420]
      %v893 = vld.sshfl [vmem:[#allocation1 + $0x10] sm:$0xff pattern:$0x75316420]
      %894 = vrot.lane.b32.xlu0 %v891, 95
      %v895 = vpop.permute.xlu0 %894
      %896 = vrot.lane.b32.xlu0 %v892, 95
      %v897 = vpop.permute.xlu0 %896
      %898 = vrot.lane.b32.xlu0 %v893, 95
      %v899 = vpop.permute.xlu0 %898
      %vm900 = vcmask 777216
      %v901 = vsel %vm900, %v895, %v897
      %v902 = vsel %vm900, %v897, %v899
      %v904 = vsel %vm274, %v884, 0
      %v907 = vsel %vm274, %v885, 0
      %v909 = vsel %vm231, %v901, 0
      %v911 = vsel %vm231, %v902, 0
      %913 = vmatpush.msra.mxu0 0.0
      %914 = vmatpush.msra.mxu0 0.0
      %915 = vmatpush.msra.mxu0 0.0
      %916 = vmatpush.msra.mxu0 0.0
      %917 = vmatpush.msra.mxu0 0.0
      %918 = vmatpush.msra.mxu0 0.0
      %919 = vmatpush.msra.mxu0 0.0
      %920 = vmatpush.msra.mxu0 0.0
      %921 = vmatpush.msra.mxu0 0.0
      %922 = vmatpush.msra.mxu0 0.0
      %923 = vmatpush.msra.mxu0 0.0
      %924 = vmatpush.msra.mxu0 0.0
      %925 = vmatpush.msra.mxu0 0.0
      %926 = vmatpush.msra.mxu0 0.0
      %927 = vmatpush.msra.mxu0 0.0
      %928 = vmatpush.msra.mxu0 %v909
      %929 = vmatmul.f32.gmra.mxu0 %v904
      %v930 = vpop.f32.mrf.mxu0
      %v931 = vadd.f32 0.0, %v930
      %932 = vmatmul.f32.gmra.mxu0 %v907
      %v933 = vpop.f32.mrf.mxu0
      %v934 = vadd.f32 0.0, %v933
      %935 = vdwg.mxu0
      %936 = vmatpush.msra.mxu0 0.0
      %937 = vmatpush.msra.mxu0 0.0
      %938 = vmatpush.msra.mxu0 0.0
      %939 = vmatpush.msra.mxu0 0.0
      %940 = vmatpush.msra.mxu0 0.0
      %941 = vmatpush.msra.mxu0 0.0
      %942 = vmatpush.msra.mxu0 0.0
      %943 = vmatpush.msra.mxu0 0.0
      %944 = vmatpush.msra.mxu0 0.0
      %945 = vmatpush.msra.mxu0 0.0
      %946 = vmatpush.msra.mxu0 0.0
      %947 = vmatpush.msra.mxu0 0.0
      %948 = vmatpush.msra.mxu0 0.0
      %949 = vmatpush.msra.mxu0 0.0
      %950 = vmatpush.msra.mxu0 0.0
      %951 = vmatpush.msra.mxu0 %v911
      %952 = vmatmul.f32.gmra.mxu0 %v904
      %v953 = vpop.f32.mrf.mxu0
      %v954 = vadd.f32 0.0, %v953
      %955 = vmatmul.f32.gmra.mxu0 %v907
      %v956 = vpop.f32.mrf.mxu0
      %v957 = vadd.f32 0.0, %v956
      %958 = vdwg.mxu0
      %v959 = vadd.f32 %v861, %v931
      %v960 = vadd.f32 %v862, %v954
      %v961 = vadd.f32 %v863, %v934
      %v962 = vadd.f32 %v864, %v957
      %v963 = vld [vmem:[%s219] sm:$0xff]
      %v964 = vld [vmem:[%s219 + $0x8] sm:$0xf]
      %s965 = scalar_lea.vmem %s2, 16
      %v966 = vld [vmem:[%s965] sm:$0x3]
      %v968 = vperm.slane %v966, 0
      %v969 = vperm.slane %v966, 1
      %v970 = vrot.slane %v969, 4
      %v971 = vsel %vm231, %v968, %v970
      %972 = vrot.lane.b32.xlu0 %v971, 34
      %v973 = vpop.permute.xlu0 %972
      %v974 = vrot.slane %v973, 4
      %vm975 = vcmask 277504
      %v976 = vsel %vm975, %v974, %v973
      %v979 = vmul.f32 %v963, %v976
      %v980 = vmul.f32 %v964, %v974
      %s981 = scalar_lea.vmem %s1, 128
      %v982 = vld [vmem:[%s981] sm:$0xff]
      %v983 = vld [vmem:[%s981 + $0x8] sm:$0xff]
      %986 = vst [vmem:[#allocation1] ss:$2 sm:$0xff] %v979
      %s987 = scalar_lea.vmem [#allocation1], 16
      %988 = vst [vmem:[%s987] ss:$2 sm:$0xff] %v980
      %v989 = vld.sshfl [vmem:[#allocation1] sm:$0xff pattern:$0x75316420]
      %v990 = vld.sshfl [vmem:[#allocation1 + $0x8] sm:$0xff pattern:$0x75316420]
      %v991 = vld.sshfl [vmem:[#allocation1 + $0x10] sm:$0xff pattern:$0x75316420]
      %992 = vrot.lane.b32.xlu0 %v989, 94
      %v993 = vpop.permute.xlu0 %992
      %994 = vrot.lane.b32.xlu0 %v990, 94
      %v995 = vpop.permute.xlu0 %994
      %996 = vrot.lane.b32.xlu0 %v991, 94
      %v997 = vpop.permute.xlu0 %996
      %vm998 = vcmask 769024
      %v999 = vsel %vm998, %v993, %v995
      %v1000 = vsel %vm998, %v995, %v997
      %v1002 = vsel %vm274, %v982, 0
      %v1005 = vsel %vm274, %v983, 0
      %v1007 = vsel %vm231, %v999, 0
      %v1009 = vsel %vm231, %v1000, 0
      %1011 = vmatpush.msra.mxu0 0.0
      %1012 = vmatpush.msra.mxu0 0.0
      %1013 = vmatpush.msra.mxu0 0.0
      %1014 = vmatpush.msra.mxu0 0.0
      %1015 = vmatpush.msra.mxu0 0.0
      %1016 = vmatpush.msra.mxu0 0.0
      %1017 = vmatpush.msra.mxu0 0.0
      %1018 = vmatpush.msra.mxu0 0.0
      %1019 = vmatpush.msra.mxu0 0.0
      %1020 = vmatpush.msra.mxu0 0.0
      %1021 = vmatpush.msra.mxu0 0.0
      %1022 = vmatpush.msra.mxu0 0.0
      %1023 = vmatpush.msra.mxu0 0.0
      %1024 = vmatpush.msra.mxu0 0.0
      %1025 = vmatpush.msra.mxu0 0.0
      %1026 = vmatpush.msra.mxu0 %v1007
      %1027 = vmatmul.f32.gmra.mxu0 %v1002
      %v1028 = vpop.f32.mrf.mxu0
      %v1029 = vadd.f32 0.0, %v1028
      %1030 = vmatmul.f32.gmra.mxu0 %v1005
      %v1031 = vpop.f32.mrf.mxu0
      %v1032 = vadd.f32 0.0, %v1031
      %1033 = vdwg.mxu0
      %1034 = vmatpush.msra.mxu0 0.0
      %1035 = vmatpush.msra.mxu0 0.0
      %1036 = vmatpush.msra.mxu0 0.0
      %1037 = vmatpush.msra.mxu0 0.0
      %1038 = vmatpush.msra.mxu0 0.0
      %1039 = vmatpush.msra.mxu0 0.0
      %1040 = vmatpush.msra.mxu0 0.0
      %1041 = vmatpush.msra.mxu0 0.0
      %1042 = vmatpush.msra.mxu0 0.0
      %1043 = vmatpush.msra.mxu0 0.0
      %1044 = vmatpush.msra.mxu0 0.0
      %1045 = vmatpush.msra.mxu0 0.0
      %1046 = vmatpush.msra.mxu0 0.0
      %1047 = vmatpush.msra.mxu0 0.0
      %1048 = vmatpush.msra.mxu0 0.0
      %1049 = vmatpush.msra.mxu0 %v1009
      %1050 = vmatmul.f32.gmra.mxu0 %v1002
      %v1051 = vpop.f32.mrf.mxu0
      %v1052 = vadd.f32 0.0, %v1051
      %1053 = vmatmul.f32.gmra.mxu0 %v1005
      %v1054 = vpop.f32.mrf.mxu0
      %v1055 = vadd.f32 0.0, %v1054
      %1056 = vdwg.mxu0
      %v1057 = vadd.f32 %v959, %v1029
      %v1058 = vadd.f32 %v960, %v1052
      %v1059 = vadd.f32 %v961, %v1032
      %v1060 = vadd.f32 %v962, %v1055
      %v1061 = vld [vmem:[%s3] sm:$0xff]
      %v1062 = vld [vmem:[%s3 + $0x8] sm:$0xff]
      %1064 = vset.pattern.permute.xlu0 0
      %1065 = vperm.xlu0 %1064, %v1061
      %v1066 = vpop.permute.xlu0 %1065
      %1069 = vset.pattern.permute.xlu0 0
      %1070 = vperm.xlu0 %1069, %v1062
      %v1071 = vpop.permute.xlu0 %1070
      %v1073 = vmul.f32 %v1057, %v1066
      %v1074 = vmul.f32 %v1058, %v1066
      %v1075 = vmul.f32 %v1059, %v1071
      %v1076 = vmul.f32 %v1060, %v1071
      %v1077 = vld [vmem:[%s4] sm:$0xff]
      %v1078 = vld [vmem:[%s4 + $0x8] sm:$0xff]
      %1080 = vset.pattern.permute.xlu0 0
      %1081 = vperm.xlu0 %1080, %v1077
      %v1082 = vpop.permute.xlu0 %1081
      %1085 = vset.pattern.permute.xlu0 0
      %1086 = vperm.xlu0 %1085, %v1078
      %v1087 = vpop.permute.xlu0 %1086
      %v1089 = vadd.f32 %v1073, %v1082
      %v1090 = vadd.f32 %v1074, %v1082
      %v1091 = vadd.f32 %v1075, %v1087
      %v1092 = vadd.f32 %v1076, %v1087
      %vm1093 = vcmp.gt.f32.partialorder %v1089, 0.0
      %vm1094 = vcmp.gt.f32.partialorder %v1090, 0.0
      %vm1095 = vcmp.gt.f32.partialorder %v1091, 0.0
      %vm1096 = vcmp.gt.f32.partialorder %v1092, 0.0
      %v1097 = vmul.f32 %v1089, 0.01
      %v1098 = vmul.f32 %v1090, 0.01
      %v1099 = vmul.f32 %v1091, 0.01
      %v1100 = vmul.f32 %v1092, 0.01
      %v1101 = vsel %vm1093, %v1089, %v1097
      %v1102 = vsel %vm1094, %v1090, %v1098
      %v1103 = vsel %vm1095, %v1091, %v1099
      %v1104 = vsel %vm1096, %v1092, %v1100
      %1105 = vst [vmem:[%s224] sm:$0xff] %v1101
      %1106 = vst [vmem:[%s224 + $0x8] sm:$0xff] %v1102
      %1107 = vst [vmem:[%s224 + $0x10] sm:$0xff] %v1103
      %1108 = vst [vmem:[%s224 + $0x18] sm:$0xff] %v1104
      %p1109 = scmp.lt.s32.totalorder %s16, 1
      %s1110 = scalar_select %p1109, %s16, 1
      %s1111 = smul.addr %s1110, 4
      %s1112 = smul.addr %s1111, 8
      %s1113 = scalar_lea.vmem %s5, %s1112
      // Predicated region
      $region41: #{simple_block_forward.3} parent=39 // pred_check
        %p1114 = pneg %p144
      $region42: #{simple_block_forward.3} parent=39 // pred_check_branch
        %1116 = sbr.rel (%p1114) target = $region44
      $region43: #{simple_block_forward.3} parent=39 // pred_region
        _
      $region44: #{simple_block_forward.3} parent=39 // pred_fallthru
        _
    $region40: #{simple_block_forward.3} parent=5 // pred_fallthru
      _
    %p1117 = scmp.le.s32.totalorder 2, %s11
    // Predicated region
    $region45: #{simple_block_forward.3} parent=5 // pred_check
      %p1118 = pneg %p1117
    $region46: #{simple_block_forward.3} parent=5 // pred_check_branch
      %1120 = sbr.rel (%p1118) target = $region48
    $region47: #{simple_block_forward.3} parent=5 // pred_region
      %s1121 = ssub.s32 %s11, 2
      // Predicated region
      $region49: #{simple_block_forward.3} parent=47 // pred_check
        %p1122 = pneg %p150
      $region50: #{simple_block_forward.3} parent=47 // pred_check_branch
        %1124 = sbr.rel (%p1122) target = $region52
      $region51: #{simple_block_forward.3} parent=47 // pred_region
        %p1125 = scmp.lt.s32.totalorder %s17, 1
        %s1126 = scalar_select %p1125, %s17, 1
        %s1127 = smul.addr %s1126, 4
        %s1128 = smul.addr %s1127, 8
        %s1129 = scalar_lea.vmem %s5, %s1128
      $region52: #{simple_block_forward.3} parent=47 // pred_fallthru
        _
    $region48: #{simple_block_forward.3} parent=5 // pred_fallthru
      _
  $region6: #{simple_block_forward.3} parent=0 // loop_footer
    %s15 = sadd.s32 1, %s11
  $region7: #{simple_block_forward.3} parent=0 // loop_footer_branch
    %10 = sbr.rel target = $region3
  $region8: #{simple_block_forward.3} parent=0 // loop_exit
    _

</llo_original>
